<compile_context>
chip_gen: v7x
topology: tpu7x:2x2x1
jax: 0.10.0
libtpu: 0.0.40
codegen_flags: <defaults>
</compile_context>

<pallas_src>
import functools

import numpy as np
import jax
import jax.numpy as jnp
from jax.experimental import pallas as pl
from jax.experimental.pallas import tpu as pltpu


def _round_up(x, m):
    return (x + m - 1) // m * m


# (kernel, stride, pad) of the 5 Conv1d layers of the Discriminator.
_CONV_SPECS = ((4, 2, 2), (4, 2, 2), (4, 2, 2), (4, 2, 4), (4, 1, 0))
_NEG_SLOPE = 0.2
_BN_EPS = 1e-5


# ----------------------------------------------------------------------------
# The single fused Pallas kernel (whole 5-layer forward)
# ----------------------------------------------------------------------------
def _disc_kernel(x_ref, s_ref, w_ref, gb_ref, o_ref, zv_ref, *,
                 cfgs, rows_p, c_p, k_max):
    """Fused forward: Conv -> LReLU -> [Conv -> BN -> LReLU] x3 -> Conv -> Sigmoid.

    x_ref : (ROWS_P, C_P)          f32  input, channels-last, zero padded
    s_ref : (5, ROWS_P, K*ROWS_P)  bf16 per-layer tap-stacked 0/1 selection S_h
    w_ref : (5, C_P, K*C_P)        bf16 per-layer tap-stacked weights W_wide,
                                        W_wide[c_in, t*C_P + c_out] = W[c_out, c_in, t]
    gb_ref: (8, C_P)               f32  rows 0..2 = gamma, rows 4..6 = beta
    o_ref : (ROWS_P, C_P)          f32  final activation (valid: rows [:B], col 0)
    zv_ref: (K*ROWS_P, C_P)        bf16 scratch for the vertical re-stack of Z

    Padded rows / channel columns stay exactly zero through every conv
    (zero S_h rows, zero-padded W columns, zero gamma/beta), so BN batch
    statistics computed as full-tile sums divided by the static valid count
    are exact, and BN-shifted padded rows are never selected downstream.
    """
    act = x_ref[...]
    for li, (k, bn_idx, n_valid, act_kind) in enumerate(cfgs):
        # --- Conv1d as two large MXU matmuls (bf16 operands, f32 accumulate) -
        # (1) all taps at once: Z[:, t*C_P:(t+1)*C_P] = act @ W_t
        z = jnp.dot(act.astype(jnp.bfloat16), w_ref[li],
                    preferred_element_type=jnp.float32)         # (ROWS_P, K*C_P)
        # (2) re-stack Z's tap blocks vertically (plain block stores).
        for t in range(k):
            zv_ref[t * rows_p:(t + 1) * rows_p, :] = (
                z[:, t * c_p:(t + 1) * c_p].astype(jnp.bfloat16))
        if k < k_max:   # unused tap blocks must not feed garbage into the dot
            zv_ref[k * rows_p:, :] = jnp.zeros(
                ((k_max - k) * rows_p, c_p), jnp.bfloat16)
        # (3) gather + tap-sum inside one MXU accumulation: Y = S_h @ Z_v
        y = jnp.dot(s_ref[li], zv_ref[...],
                    preferred_element_type=jnp.float32)          # (ROWS_P, C_P)

        # --- fused BatchNorm1d (training-mode batch stats) as per-ch affine --
        if bn_idx is not None:
            inv_n = 1.0 / float(n_valid)
            mean = jnp.sum(y, axis=0, keepdims=True) * inv_n         # (1, C_P)
            ex2 = jnp.sum(y * y, axis=0, keepdims=True) * inv_n      # (1, C_P)
            var = ex2 - mean * mean                                  # biased var
            gamma = gb_ref[bn_idx:bn_idx + 1, :]
            beta = gb_ref[4 + bn_idx:5 + bn_idx, :]
            scale = gamma * jax.lax.rsqrt(var + _BN_EPS)             # (1, C_P)
            shift = beta - mean * scale
            y = y * scale + shift

        # --- fused activation -------------------------------------------------
        if act_kind == "leaky":
            y = jnp.where(y >= 0, y, _NEG_SLOPE * y)
        else:  # "sigmoid"
            y = jax.nn.sigmoid(y)
        act = y

    o_ref[...] = act


# ----------------------------------------------------------------------------
# One-time packing of constants (weights, BN params, im2col selection matrices)
# ----------------------------------------------------------------------------
def _build_selection_h(batch, l_in, l_out, k, stride, pad, rows_p, k_max):
    """S_h[b*l_out+j, t*rows_p + b*l_in+i] = 1 iff i = j*stride + t - pad is valid."""
    s = np.zeros((rows_p, k_max * rows_p), np.float32)
    for t in range(k):
        for b in range(batch):
            for j in range(l_out):
                i = j * stride + t - pad
                if 0 <= i < l_in:
                    s[b * l_out + j, t * rows_p + b * l_in + i] = 1.0
    return s


def _pack_conv_weight_wide(w, c_p, k_max):
    """(C_out,C_in,K) -> (C_P, K*C_P) with W_wide[c_in, t*C_P+c_out] = W[c_out,c_in,t]."""
    w = np.asarray(w, np.float32)
    cout, cin, k = w.shape
    wp = np.zeros((c_p, k_max * c_p), np.float32)
    for t in range(k):
        wp[:cin, t * c_p:t * c_p + cout] = w[:, :, t].T
    return wp


def init_params(key, n, ndf):
    keys = jax.random.split(key, 5)
    scale = 0.05
    return {
        "W1": jax.random.normal(keys[0], (ndf, n, 4), jnp.float32) * scale,
        "W2": jax.random.normal(keys[1], (ndf * 2, ndf, 4), jnp.float32) * scale,
        "W3": jax.random.normal(keys[2], (ndf * 4, ndf * 2, 4), jnp.float32) * scale,
        "W4": jax.random.normal(keys[3], (ndf * 8, ndf * 4, 4), jnp.float32) * scale,
        "W5": jax.random.normal(keys[4], (1, ndf * 8, 4), jnp.float32) * scale,
        # BatchNorm1d default init: weight=1, bias=0
        "g2": jnp.ones((ndf * 2,), jnp.float32), "b2": jnp.zeros((ndf * 2,), jnp.float32),
        "g3": jnp.ones((ndf * 4,), jnp.float32), "b3": jnp.zeros((ndf * 4,), jnp.float32),
        "g4": jnp.ones((ndf * 8,), jnp.float32), "b4": jnp.zeros((ndf * 8,), jnp.float32),
    }


def build_discriminator(params, n, ndf, batch, length):
    """Pack all constants once; return (packed_arrays, jitted_forward)."""
    channels = [n, ndf, ndf * 2, ndf * 4, ndf * 8, 1]
    c_p = _round_up(max(channels), 128)

    lens = [length]
    for (k, s, p) in _CONV_SPECS:
        lens.append((lens[-1] + 2 * p - k) // s + 1)
    rows = [batch * l for l in lens]
    rows_p = _round_up(max(rows), 8)
    k_max = max(k for (k, _, _) in _CONV_SPECS)

    # Per-layer tap-stacked 0/1 selections, bf16, lane-dense last dim (K*ROWS_P).
    s_all = np.stack([
        _build_selection_h(batch, lens[li], lens[li + 1], k, s, p, rows_p, k_max)
        for li, (k, s, p) in enumerate(_CONV_SPECS)], axis=0)

    # Per-layer tap-stacked weights, bf16 (single-pass MXU operands).
    w_all = np.stack([
        _pack_conv_weight_wide(params[f"W{i + 1}"], c_p, k_max)
        for i in range(5)], axis=0)

    gb = np.zeros((8, c_p), np.float32)
    for bi, (gk, bk) in enumerate((("g2", "b2"), ("g3", "b3"), ("g4", "b4"))):
        gb[bi, :params[gk].shape[0]] = np.asarray(params[gk])
        gb[4 + bi, :params[bk].shape[0]] = np.asarray(params[bk])

    cfgs = []
    for li, (k, s, p) in enumerate(_CONV_SPECS):
        bn_idx = li - 1 if li in (1, 2, 3) else None
        act_kind = "sigmoid" if li == len(_CONV_SPECS) - 1 else "leaky"
        cfgs.append((k, bn_idx, rows[li + 1], act_kind))
    cfgs = tuple(cfgs)

    packed = {
        "S": jnp.asarray(s_all, jnp.bfloat16),
        "W": jnp.asarray(w_all, jnp.bfloat16),
        "gb": jnp.asarray(gb, jnp.float32),
    }

    kern = functools.partial(_disc_kernel, cfgs=cfgs,
                             rows_p=rows_p, c_p=c_p, k_max=k_max)

    n_layers = len(_CONV_SPECS)
    grid_spec = pltpu.PrefetchScalarGridSpec(
        num_scalar_prefetch=0,
        grid=(1,),
        in_specs=[
            pl.BlockSpec((rows_p, c_p), lambda i: (0, 0)),
            pl.BlockSpec((n_layers, rows_p, k_max * rows_p), lambda i: (0, 0, 0)),
            pl.BlockSpec((n_layers, c_p, k_max * c_p), lambda i: (0, 0, 0)),
            pl.BlockSpec((8, c_p), lambda i: (0, 0)),
        ],
        out_specs=pl.BlockSpec((rows_p, c_p), lambda i: (0, 0)),
        scratch_shapes=[pltpu.VMEM((k_max * rows_p, c_p), jnp.bfloat16)],
    )

    # Advisory cost hint for XLA's scheduler around the tiny custom call.
    flops = sum(2 * rows_p * c_p * (k_max * c_p)
                + 2 * rows_p * (k_max * rows_p) * c_p for _ in _CONV_SPECS)
    transcendentals = 3 * c_p + rows_p * c_p          # BN rsqrt + final sigmoid
    bytes_accessed = (2 * rows_p * c_p * 4            # x in, out
                      + packed["S"].size * 2 + packed["W"].size * 2
                      + packed["gb"].size * 4)
    cost = pl.CostEstimate(flops=flops, transcendentals=transcendentals,
                           bytes_accessed=bytes_accessed)

    def forward(packed_arrays, x):
        b, cin, l = x.shape
        # Single layout conversion: NCW -> channels-last (B*L, C) tile, zero pad.
        x2d = jnp.transpose(x, (0, 2, 1)).reshape(b * l, cin)
        x_p = jnp.zeros((rows_p, c_p), jnp.float32).at[:b * l, :cin].set(
            x2d.astype(jnp.float32))
        out2d = pl.pallas_call(
            kern,
            out_shape=jax.ShapeDtypeStruct((rows_p, c_p), jnp.float32),
            grid_spec=grid_spec,
            compiler_params=pltpu.CompilerParams(
                dimension_semantics=("arbitrary",)),
            cost_estimate=cost,
        )(x_p, packed_arrays["S"], packed_arrays["W"], packed_arrays["gb"])
        # Final layer has L_out = 1 and C_out = 1: valid at rows [:B], column 0.
        return out2d[:b, 0:1].reshape(b, 1, 1)

    return packed, jax.jit(forward)


# ----------------------------------------------------------------------------
# Plain-JAX reference (cross-check only)
# ----------------------------------------------------------------------------
def _ref_forward(params, x):
    def conv(h, w, stride, pad):
        return jax.lax.conv_general_dilated(
            h, w, window_strides=(stride,), padding=[(pad, pad)],
            dimension_numbers=("NCH", "OIH", "NCH"),
            precision=jax.lax.Precision.HIGHEST)

    def leaky(h):
        return jnp.where(h >= 0, h, _NEG_SLOPE * h)

    h = leaky(conv(x, params["W1"], 2, 2))
    for wk, gk, bk, s, p in (("W2", "g2", "b2", 2, 2),
                             ("W3", "g3", "b3", 2, 2),
                             ("W4", "g4", "b4", 2, 4)):
        h = conv(h, params[wk], s, p)
        mean = jnp.mean(h, axis=(0, 2), keepdims=True)
        var = jnp.var(h, axis=(0, 2), keepdims=True)   # biased (PyTorch train mode)
        h = (h - mean) * jax.lax.rsqrt(var + _BN_EPS)
        h = h * params[gk][None, :, None] + params[bk][None, :, None]
        h = leaky(h)
    h = conv(h, params["W5"], 1, 0)
    return jax.nn.sigmoid(h)


if __name__ == "__main__":
    key = jax.random.PRNGKey(0)
    n, ndf = 4, 16
    B, L = 2, 16
    pkey, xkey = jax.random.split(key)
    params = init_params(pkey, n, ndf)
    x = jax.random.normal(xkey, (B, n, L), jnp.float32)

    packed, forward = build_discriminator(params, n, ndf, B, L)
    out = jax.block_until_ready(forward(packed, x))

    assert out.shape == (B, 1, 1), out.shape
    assert bool(jnp.all(jnp.isfinite(out)))
    assert bool(jnp.all((out >= 0.0) & (out <= 1.0)))

    # Cross-check against a plain-JAX reference.  Tolerance covers bf16 MXU
    # operands (review-driven change) vs. HIGHEST-precision f32 XLA convs.
    ref = jax.block_until_ready(_ref_forward(params, x))
    max_err = float(jnp.max(jnp.abs(out - ref)))
    assert max_err < 5e-2, f"max abs err {max_err}"

    print("KERNEL_OK")
</pallas_src>

<mosaic_0001>
module attributes {stable_mosaic.version = 11 : i64} {
  func.func @_disc_kernel(%arg0: i32, %arg1: memref<32x128xf32, #tpu.memory_space<vmem>>, %arg2: memref<5x32x128xbf16, #tpu.memory_space<vmem>>, %arg3: memref<5x128x512xbf16, #tpu.memory_space<vmem>>, %arg4: memref<8x128xf32, #tpu.memory_space<vmem>>, %arg5: memref<32x128xf32, #tpu.memory_space<vmem>>, %arg6: memref<128x128xbf16, #tpu.memory_space<vmem>>) attributes {dimension_semantics = [#tpu.dimension_semantics<arbitrary>], iteration_bounds = array<i64: 1>, scalar_prefetch = 0 : i64, scratch_operands = 1 : i64, tpu.core_type = #tpu.core_type<tc>, window_params = [{pipeline_mode = #tpu.pipeline_mode<synchronous>, transform_indices = @transform_0, window_bounds = array<i64: 32, 128>}, {pipeline_mode = #tpu.pipeline_mode<synchronous>, transform_indices = @transform_1, window_bounds = array<i64: 5, 32, 128>}, {pipeline_mode = #tpu.pipeline_mode<synchronous>, transform_indices = @transform_2, window_bounds = array<i64: 5, 128, 512>}, {pipeline_mode = #tpu.pipeline_mode<synchronous>, transform_indices = @transform_3, window_bounds = array<i64: 8, 128>}, {pipeline_mode = #tpu.pipeline_mode<synchronous>, transform_indices = @transform_4, window_bounds = array<i64: 32, 128>}]} {
    %c0 = arith.constant 0 : index
    %c0_0 = arith.constant 0 : index
    %0 = vector.load %arg1[%c0, %c0_0] : memref<32x128xf32, #tpu.memory_space<vmem>>, vector<32x128xf32>
    %1 = arith.truncf %0 : vector<32x128xf32> to vector<32x128xbf16>
    %c0_1 = arith.constant 0 : index
    %c0_2 = arith.constant 0 : index
    %c0_3 = arith.constant 0 : index
    %2 = vector.load %arg3[%c0_1, %c0_2, %c0_3] : memref<5x128x512xbf16, #tpu.memory_space<vmem>>, vector<1x128x512xbf16>
    %3 = vector.shape_cast %2 : vector<1x128x512xbf16> to vector<128x512xbf16>
    %cst = arith.constant dense<0.000000e+00> : vector<32x512xf32>
    %4 = tpu.matmul %1, %3, %cst {dimension_numbers = #tpu.dot_dimension_numbers<[1], [0], [0], [1], [0, 0, 1, 1], [], []>} : vector<32x128xbf16>, vector<128x512xbf16>, vector<32x512xf32> -> vector<32x512xf32>
    %5 = vector.extract_strided_slice %4 {offsets = [0, 0], sizes = [32, 128], strides = [1, 1]} : vector<32x512xf32> to vector<32x128xf32>
    %6 = arith.truncf %5 : vector<32x128xf32> to vector<32x128xbf16>
    %c0_4 = arith.constant 0 : index
    %c0_5 = arith.constant 0 : index
    %7 = vector.load %arg6[%c0_4, %c0_5] : memref<128x128xbf16, #tpu.memory_space<vmem>>, vector<32x128xbf16>
    tpu.vector_store %arg6[%c0_4, %c0_5], %6 {strides = array<i32>} : memref<128x128xbf16, #tpu.memory_space<vmem>>, vector<32x128xbf16>,
    %8 = vector.extract_strided_slice %4 {offsets = [0, 128], sizes = [32, 128], strides = [1, 1]} : vector<32x512xf32> to vector<32x128xf32>
    %9 = arith.truncf %8 : vector<32x128xf32> to vector<32x128xbf16>
    %c32 = arith.constant 32 : index
    %c0_6 = arith.constant 0 : index
    %10 = vector.load %arg6[%c32, %c0_6] : memref<128x128xbf16, #tpu.memory_space<vmem>>, vector<32x128xbf16>
    tpu.vector_store %arg6[%c32, %c0_6], %9 {strides = array<i32>} : memref<128x128xbf16, #tpu.memory_space<vmem>>, vector<32x128xbf16>,
    %11 = vector.extract_strided_slice %4 {offsets = [0, 256], sizes = [32, 128], strides = [1, 1]} : vector<32x512xf32> to vector<32x128xf32>
    %12 = arith.truncf %11 : vector<32x128xf32> to vector<32x128xbf16>
    %c64 = arith.constant 64 : index
    %c0_7 = arith.constant 0 : index
    %13 = vector.load %arg6[%c64, %c0_7] : memref<128x128xbf16, #tpu.memory_space<vmem>>, vector<32x128xbf16>
    tpu.vector_store %arg6[%c64, %c0_7], %12 {strides = array<i32>} : memref<128x128xbf16, #tpu.memory_space<vmem>>, vector<32x128xbf16>,
    %14 = vector.extract_strided_slice %4 {offsets = [0, 384], sizes = [32, 128], strides = [1, 1]} : vector<32x512xf32> to vector<32x128xf32>
    %15 = arith.truncf %14 : vector<32x128xf32> to vector<32x128xbf16>
    %c96 = arith.constant 96 : index
    %c0_8 = arith.constant 0 : index
    %16 = vector.load %arg6[%c96, %c0_8] : memref<128x128xbf16, #tpu.memory_space<vmem>>, vector<32x128xbf16>
    tpu.vector_store %arg6[%c96, %c0_8], %15 {strides = array<i32>} : memref<128x128xbf16, #tpu.memory_space<vmem>>, vector<32x128xbf16>,
    %c0_9 = arith.constant 0 : index
    %c0_10 = arith.constant 0 : index
    %c0_11 = arith.constant 0 : index
    %17 = vector.load %arg2[%c0_9, %c0_10, %c0_11] : memref<5x32x128xbf16, #tpu.memory_space<vmem>>, vector<1x32x128xbf16>
    %18 = vector.shape_cast %17 : vector<1x32x128xbf16> to vector<32x128xbf16>
    %c0_12 = arith.constant 0 : index
    %c0_13 = arith.constant 0 : index
    %19 = vector.load %arg6[%c0_12, %c0_13] : memref<128x128xbf16, #tpu.memory_space<vmem>>, vector<128x128xbf16>
    %cst_14 = arith.constant dense<0.000000e+00> : vector<32x128xf32>
    %20 = tpu.matmul %18, %19, %cst_14 {dimension_numbers = #tpu.dot_dimension_numbers<[1], [0], [0], [1], [0, 0, 1, 1], [], []>} : vector<32x128xbf16>, vector<128x128xbf16>, vector<32x128xf32> -> vector<32x128xf32>
    %cst_15 = arith.constant 0.000000e+00 : f32
    %21 = vector.broadcast %cst_15 : f32 to vector<32x128xf32>
    %22 = arith.cmpf oge, %20, %21 : vector<32x128xf32>
    %cst_16 = arith.constant 2.000000e-01 : f32
    %23 = vector.broadcast %cst_16 : f32 to vector<32x128xf32>
    %24 = arith.mulf %23, %20 : vector<32x128xf32>
    %25 = arith.select %22, %20, %24 : vector<32x128xi1>, vector<32x128xf32>
    %26 = arith.truncf %25 : vector<32x128xf32> to vector<32x128xbf16>
    %c1 = arith.constant 1 : index
    %c0_17 = arith.constant 0 : index
    %c0_18 = arith.constant 0 : index
    %27 = vector.load %arg3[%c1, %c0_17, %c0_18] : memref<5x128x512xbf16, #tpu.memory_space<vmem>>, vector<1x128x512xbf16>
    %28 = vector.shape_cast %27 : vector<1x128x512xbf16> to vector<128x512xbf16>
    %cst_19 = arith.constant dense<0.000000e+00> : vector<32x512xf32>
    %29 = tpu.matmul %26, %28, %cst_19 {dimension_numbers = #tpu.dot_dimension_numbers<[1], [0], [0], [1], [0, 0, 1, 1], [], []>} : vector<32x128xbf16>, vector<128x512xbf16>, vector<32x512xf32> -> vector<32x512xf32>
    %30 = vector.extract_strided_slice %29 {offsets = [0, 0], sizes = [32, 128], strides = [1, 1]} : vector<32x512xf32> to vector<32x128xf32>
    %31 = arith.truncf %30 : vector<32x128xf32> to vector<32x128xbf16>
    %c0_20 = arith.constant 0 : index
    %c0_21 = arith.constant 0 : index
    %32 = vector.load %arg6[%c0_20, %c0_21] : memref<128x128xbf16, #tpu.memory_space<vmem>>, vector<32x128xbf16>
    tpu.vector_store %arg6[%c0_20, %c0_21], %31 {strides = array<i32>} : memref<128x128xbf16, #tpu.memory_space<vmem>>, vector<32x128xbf16>,
    %33 = vector.extract_strided_slice %29 {offsets = [0, 128], sizes = [32, 128], strides = [1, 1]} : vector<32x512xf32> to vector<32x128xf32>
    %34 = arith.truncf %33 : vector<32x128xf32> to vector<32x128xbf16>
    %c32_22 = arith.constant 32 : index
    %c0_23 = arith.constant 0 : index
    %35 = vector.load %arg6[%c32_22, %c0_23] : memref<128x128xbf16, #tpu.memory_space<vmem>>, vector<32x128xbf16>
    tpu.vector_store %arg6[%c32_22, %c0_23], %34 {strides = array<i32>} : memref<128x128xbf16, #tpu.memory_space<vmem>>, vector<32x128xbf16>,
    %36 = vector.extract_strided_slice %29 {offsets = [0, 256], sizes = [32, 128], strides = [1, 1]} : vector<32x512xf32> to vector<32x128xf32>
    %37 = arith.truncf %36 : vector<32x128xf32> to vector<32x128xbf16>
    %c64_24 = arith.constant 64 : index
    %c0_25 = arith.constant 0 : index
    %38 = vector.load %arg6[%c64_24, %c0_25] : memref<128x128xbf16, #tpu.memory_space<vmem>>, vector<32x128xbf16>
    tpu.vector_store %arg6[%c64_24, %c0_25], %37 {strides = array<i32>} : memref<128x128xbf16, #tpu.memory_space<vmem>>, vector<32x128xbf16>,
    %39 = vector.extract_strided_slice %29 {offsets = [0, 384], sizes = [32, 128], strides = [1, 1]} : vector<32x512xf32> to vector<32x128xf32>
    %40 = arith.truncf %39 : vector<32x128xf32> to vector<32x128xbf16>
    %c96_26 = arith.constant 96 : index
    %c0_27 = arith.constant 0 : index
    %41 = vector.load %arg6[%c96_26, %c0_27] : memref<128x128xbf16, #tpu.memory_space<vmem>>, vector<32x128xbf16>
    tpu.vector_store %arg6[%c96_26, %c0_27], %40 {strides = array<i32>} : memref<128x128xbf16, #tpu.memory_space<vmem>>, vector<32x128xbf16>,
    %c1_28 = arith.constant 1 : index
    %c0_29 = arith.constant 0 : index
    %c0_30 = arith.constant 0 : index
    %42 = vector.load %arg2[%c1_28, %c0_29, %c0_30] : memref<5x32x128xbf16, #tpu.memory_space<vmem>>, vector<1x32x128xbf16>
    %43 = vector.shape_cast %42 : vector<1x32x128xbf16> to vector<32x128xbf16>
    %c0_31 = arith.constant 0 : index
    %c0_32 = arith.constant 0 : index
    %44 = vector.load %arg6[%c0_31, %c0_32] : memref<128x128xbf16, #tpu.memory_space<vmem>>, vector<128x128xbf16>
    %cst_33 = arith.constant dense<0.000000e+00> : vector<32x128xf32>
    %45 = tpu.matmul %43, %44, %cst_33 {dimension_numbers = #tpu.dot_dimension_numbers<[1], [0], [0], [1], [0, 0, 1, 1], [], []>} : vector<32x128xbf16>, vector<128x128xbf16>, vector<32x128xf32> -> vector<32x128xf32>
    %cst_34 = arith.constant dense<0.000000e+00> : vector<128xf32>
    %46 = vector.multi_reduction <add>, %45, %cst_34 [0] : vector<32x128xf32> to vector<128xf32>
    %47 = vector.shape_cast %46 : vector<128xf32> to vector<1x128xf32>
    %cst_35 = arith.constant 1.000000e-01 : f32
    %48 = vector.broadcast %cst_35 : f32 to vector<1x128xf32>
    %49 = arith.mulf %47, %48 : vector<1x128xf32>
    %50 = arith.mulf %45, %45 : vector<32x128xf32>
    %cst_36 = arith.constant dense<0.000000e+00> : vector<128xf32>
    %51 = vector.multi_reduction <add>, %50, %cst_36 [0] : vector<32x128xf32> to vector<128xf32>
    %52 = vector.shape_cast %51 : vector<128xf32> to vector<1x128xf32>
    %cst_37 = arith.constant 1.000000e-01 : f32
    %53 = vector.broadcast %cst_37 : f32 to vector<1x128xf32>
    %54 = arith.mulf %52, %53 : vector<1x128xf32>
    %55 = arith.mulf %49, %49 : vector<1x128xf32>
    %56 = arith.subf %54, %55 : vector<1x128xf32>
    %c0_38 = arith.constant 0 : index
    %c0_39 = arith.constant 0 : index
    %57 = vector.load %arg4[%c0_38, %c0_39] : memref<8x128xf32, #tpu.memory_space<vmem>>, vector<1x128xf32>
    %c4 = arith.constant 4 : index
    %c0_40 = arith.constant 0 : index
    %58 = vector.load %arg4[%c4, %c0_40] : memref<8x128xf32, #tpu.memory_space<vmem>>, vector<1x128xf32>
    %cst_41 = arith.constant 9.99999974E-6 : f32
    %59 = vector.broadcast %cst_41 : f32 to vector<1x128xf32>
    %60 = arith.addf %56, %59 : vector<1x128xf32>
    %61 = math.rsqrt %60 : vector<1x128xf32>
    %62 = arith.mulf %57, %61 : vector<1x128xf32>
    %63 = arith.mulf %49, %62 : vector<1x128xf32>
    %64 = arith.subf %58, %63 : vector<1x128xf32>
    %65 = vector.broadcast %62 : vector<1x128xf32> to vector<32x128xf32>
    %66 = arith.mulf %45, %65 : vector<32x128xf32>
    %67 = vector.broadcast %64 : vector<1x128xf32> to vector<32x128xf32>
    %68 = arith.addf %66, %67 : vector<32x128xf32>
    %cst_42 = arith.constant 0.000000e+00 : f32
    %69 = vector.broadcast %cst_42 : f32 to vector<32x128xf32>
    %70 = arith.cmpf oge, %68, %69 : vector<32x128xf32>
    %cst_43 = arith.constant 2.000000e-01 : f32
    %71 = vector.broadcast %cst_43 : f32 to vector<32x128xf32>
    %72 = arith.mulf %71, %68 : vector<32x128xf32>
    %73 = arith.select %70, %68, %72 : vector<32x128xi1>, vector<32x128xf32>
    %74 = arith.truncf %73 : vector<32x128xf32> to vector<32x128xbf16>
    %c2 = arith.constant 2 : index
    %c0_44 = arith.constant 0 : index
    %c0_45 = arith.constant 0 : index
    %75 = vector.load %arg3[%c2, %c0_44, %c0_45] : memref<5x128x512xbf16, #tpu.memory_space<vmem>>, vector<1x128x512xbf16>
    %76 = vector.shape_cast %75 : vector<1x128x512xbf16> to vector<128x512xbf16>
    %cst_46 = arith.constant dense<0.000000e+00> : vector<32x512xf32>
    %77 = tpu.matmul %74, %76, %cst_46 {dimension_numbers = #tpu.dot_dimension_numbers<[1], [0], [0], [1], [0, 0, 1, 1], [], []>} : vector<32x128xbf16>, vector<128x512xbf16>, vector<32x512xf32> -> vector<32x512xf32>
    %78 = vector.extract_strided_slice %77 {offsets = [0, 0], sizes = [32, 128], strides = [1, 1]} : vector<32x512xf32> to vector<32x128xf32>
    %79 = arith.truncf %78 : vector<32x128xf32> to vector<32x128xbf16>
    %c0_47 = arith.constant 0 : index
    %c0_48 = arith.constant 0 : index
    %80 = vector.load %arg6[%c0_47, %c0_48] : memref<128x128xbf16, #tpu.memory_space<vmem>>, vector<32x128xbf16>
    tpu.vector_store %arg6[%c0_47, %c0_48], %79 {strides = array<i32>} : memref<128x128xbf16, #tpu.memory_space<vmem>>, vector<32x128xbf16>,
    %81 = vector.extract_strided_slice %77 {offsets = [0, 128], sizes = [32, 128], strides = [1, 1]} : vector<32x512xf32> to vector<32x128xf32>
    %82 = arith.truncf %81 : vector<32x128xf32> to vector<32x128xbf16>
    %c32_49 = arith.constant 32 : index
    %c0_50 = arith.constant 0 : index
    %83 = vector.load %arg6[%c32_49, %c0_50] : memref<128x128xbf16, #tpu.memory_space<vmem>>, vector<32x128xbf16>
    tpu.vector_store %arg6[%c32_49, %c0_50], %82 {strides = array<i32>} : memref<128x128xbf16, #tpu.memory_space<vmem>>, vector<32x128xbf16>,
    %84 = vector.extract_strided_slice %77 {offsets = [0, 256], sizes = [32, 128], strides = [1, 1]} : vector<32x512xf32> to vector<32x128xf32>
    %85 = arith.truncf %84 : vector<32x128xf32> to vector<32x128xbf16>
    %c64_51 = arith.constant 64 : index
    %c0_52 = arith.constant 0 : index
    %86 = vector.load %arg6[%c64_51, %c0_52] : memref<128x128xbf16, #tpu.memory_space<vmem>>, vector<32x128xbf16>
    tpu.vector_store %arg6[%c64_51, %c0_52], %85 {strides = array<i32>} : memref<128x128xbf16, #tpu.memory_space<vmem>>, vector<32x128xbf16>,
    %87 = vector.extract_strided_slice %77 {offsets = [0, 384], sizes = [32, 128], strides = [1, 1]} : vector<32x512xf32> to vector<32x128xf32>
    %88 = arith.truncf %87 : vector<32x128xf32> to vector<32x128xbf16>
    %c96_53 = arith.constant 96 : index
    %c0_54 = arith.constant 0 : index
    %89 = vector.load %arg6[%c96_53, %c0_54] : memref<128x128xbf16, #tpu.memory_space<vmem>>, vector<32x128xbf16>
    tpu.vector_store %arg6[%c96_53, %c0_54], %88 {strides = array<i32>} : memref<128x128xbf16, #tpu.memory_space<vmem>>, vector<32x128xbf16>,
    %c2_55 = arith.constant 2 : index
    %c0_56 = arith.constant 0 : index
    %c0_57 = arith.constant 0 : index
    %90 = vector.load %arg2[%c2_55, %c0_56, %c0_57] : memref<5x32x128xbf16, #tpu.memory_space<vmem>>, vector<1x32x128xbf16>
    %91 = vector.shape_cast %90 : vector<1x32x128xbf16> to vector<32x128xbf16>
    %c0_58 = arith.constant 0 : index
    %c0_59 = arith.constant 0 : index
    %92 = vector.load %arg6[%c0_58, %c0_59] : memref<128x128xbf16, #tpu.memory_space<vmem>>, vector<128x128xbf16>
    %cst_60 = arith.constant dense<0.000000e+00> : vector<32x128xf32>
    %93 = tpu.matmul %91, %92, %cst_60 {dimension_numbers = #tpu.dot_dimension_numbers<[1], [0], [0], [1], [0, 0, 1, 1], [], []>} : vector<32x128xbf16>, vector<128x128xbf16>, vector<32x128xf32> -> vector<32x128xf32>
    %cst_61 = arith.constant dense<0.000000e+00> : vector<128xf32>
    %94 = vector.multi_reduction <add>, %93, %cst_61 [0] : vector<32x128xf32> to vector<128xf32>
    %95 = vector.shape_cast %94 : vector<128xf32> to vector<1x128xf32>
    %cst_62 = arith.constant 0.166666672 : f32
    %96 = vector.broadcast %cst_62 : f32 to vector<1x128xf32>
    %97 = arith.mulf %95, %96 : vector<1x128xf32>
    %98 = arith.mulf %93, %93 : vector<32x128xf32>
    %cst_63 = arith.constant dense<0.000000e+00> : vector<128xf32>
    %99 = vector.multi_reduction <add>, %98, %cst_63 [0] : vector<32x128xf32> to vector<128xf32>
    %100 = vector.shape_cast %99 : vector<128xf32> to vector<1x128xf32>
    %cst_64 = arith.constant 0.166666672 : f32
    %101 = vector.broadcast %cst_64 : f32 to vector<1x128xf32>
    %102 = arith.mulf %100, %101 : vector<1x128xf32>
    %103 = arith.mulf %97, %97 : vector<1x128xf32>
    %104 = arith.subf %102, %103 : vector<1x128xf32>
    %c1_65 = arith.constant 1 : index
    %c0_66 = arith.constant 0 : index
    %105 = vector.load %arg4[%c1_65, %c0_66] : memref<8x128xf32, #tpu.memory_space<vmem>>, vector<1x128xf32>
    %c5 = arith.constant 5 : index
    %c0_67 = arith.constant 0 : index
    %106 = vector.load %arg4[%c5, %c0_67] : memref<8x128xf32, #tpu.memory_space<vmem>>, vector<1x128xf32>
    %cst_68 = arith.constant 9.99999974E-6 : f32
    %107 = vector.broadcast %cst_68 : f32 to vector<1x128xf32>
    %108 = arith.addf %104, %107 : vector<1x128xf32>
    %109 = math.rsqrt %108 : vector<1x128xf32>
    %110 = arith.mulf %105, %109 : vector<1x128xf32>
    %111 = arith.mulf %97, %110 : vector<1x128xf32>
    %112 = arith.subf %106, %111 : vector<1x128xf32>
    %113 = vector.broadcast %110 : vector<1x128xf32> to vector<32x128xf32>
    %114 = arith.mulf %93, %113 : vector<32x128xf32>
    %115 = vector.broadcast %112 : vector<1x128xf32> to vector<32x128xf32>
    %116 = arith.addf %114, %115 : vector<32x128xf32>
    %cst_69 = arith.constant 0.000000e+00 : f32
    %117 = vector.broadcast %cst_69 : f32 to vector<32x128xf32>
    %118 = arith.cmpf oge, %116, %117 : vector<32x128xf32>
    %cst_70 = arith.constant 2.000000e-01 : f32
    %119 = vector.broadcast %cst_70 : f32 to vector<32x128xf32>
    %120 = arith.mulf %119, %116 : vector<32x128xf32>
    %121 = arith.select %118, %116, %120 : vector<32x128xi1>, vector<32x128xf32>
    %122 = arith.truncf %121 : vector<32x128xf32> to vector<32x128xbf16>
    %c3 = arith.constant 3 : index
    %c0_71 = arith.constant 0 : index
    %c0_72 = arith.constant 0 : index
    %123 = vector.load %arg3[%c3, %c0_71, %c0_72] : memref<5x128x512xbf16, #tpu.memory_space<vmem>>, vector<1x128x512xbf16>
    %124 = vector.shape_cast %123 : vector<1x128x512xbf16> to vector<128x512xbf16>
    %cst_73 = arith.constant dense<0.000000e+00> : vector<32x512xf32>
    %125 = tpu.matmul %122, %124, %cst_73 {dimension_numbers = #tpu.dot_dimension_numbers<[1], [0], [0], [1], [0, 0, 1, 1], [], []>} : vector<32x128xbf16>, vector<128x512xbf16>, vector<32x512xf32> -> vector<32x512xf32>
    %126 = vector.extract_strided_slice %125 {offsets = [0, 0], sizes = [32, 128], strides = [1, 1]} : vector<32x512xf32> to vector<32x128xf32>
    %127 = arith.truncf %126 : vector<32x128xf32> to vector<32x128xbf16>
    %c0_74 = arith.constant 0 : index
    %c0_75 = arith.constant 0 : index
    %128 = vector.load %arg6[%c0_74, %c0_75] : memref<128x128xbf16, #tpu.memory_space<vmem>>, vector<32x128xbf16>
    tpu.vector_store %arg6[%c0_74, %c0_75], %127 {strides = array<i32>} : memref<128x128xbf16, #tpu.memory_space<vmem>>, vector<32x128xbf16>,
    %129 = vector.extract_strided_slice %125 {offsets = [0, 128], sizes = [32, 128], strides = [1, 1]} : vector<32x512xf32> to vector<32x128xf32>
    %130 = arith.truncf %129 : vector<32x128xf32> to vector<32x128xbf16>
    %c32_76 = arith.constant 32 : index
    %c0_77 = arith.constant 0 : index
    %131 = vector.load %arg6[%c32_76, %c0_77] : memref<128x128xbf16, #tpu.memory_space<vmem>>, vector<32x128xbf16>
    tpu.vector_store %arg6[%c32_76, %c0_77], %130 {strides = array<i32>} : memref<128x128xbf16, #tpu.memory_space<vmem>>, vector<32x128xbf16>,
    %132 = vector.extract_strided_slice %125 {offsets = [0, 256], sizes = [32, 128], strides = [1, 1]} : vector<32x512xf32> to vector<32x128xf32>
    %133 = arith.truncf %132 : vector<32x128xf32> to vector<32x128xbf16>
    %c64_78 = arith.constant 64 : index
    %c0_79 = arith.constant 0 : index
    %134 = vector.load %arg6[%c64_78, %c0_79] : memref<128x128xbf16, #tpu.memory_space<vmem>>, vector<32x128xbf16>
    tpu.vector_store %arg6[%c64_78, %c0_79], %133 {strides = array<i32>} : memref<128x128xbf16, #tpu.memory_space<vmem>>, vector<32x128xbf16>,
    %135 = vector.extract_strided_slice %125 {offsets = [0, 384], sizes = [32, 128], strides = [1, 1]} : vector<32x512xf32> to vector<32x128xf32>
    %136 = arith.truncf %135 : vector<32x128xf32> to vector<32x128xbf16>
    %c96_80 = arith.constant 96 : index
    %c0_81 = arith.constant 0 : index
    %137 = vector.load %arg6[%c96_80, %c0_81] : memref<128x128xbf16, #tpu.memory_space<vmem>>, vector<32x128xbf16>
    tpu.vector_store %arg6[%c96_80, %c0_81], %136 {strides = array<i32>} : memref<128x128xbf16, #tpu.memory_space<vmem>>, vector<32x128xbf16>,
    %c3_82 = arith.constant 3 : index
    %c0_83 = arith.constant 0 : index
    %c0_84 = arith.constant 0 : index
    %138 = vector.load %arg2[%c3_82, %c0_83, %c0_84] : memref<5x32x128xbf16, #tpu.memory_space<vmem>>, vector<1x32x128xbf16>
    %139 = vector.shape_cast %138 : vector<1x32x128xbf16> to vector<32x128xbf16>
    %c0_85 = arith.constant 0 : index
    %c0_86 = arith.constant 0 : index
    %140 = vector.load %arg6[%c0_85, %c0_86] : memref<128x128xbf16, #tpu.memory_space<vmem>>, vector<128x128xbf16>
    %cst_87 = arith.constant dense<0.000000e+00> : vector<32x128xf32>
    %141 = tpu.matmul %139, %140, %cst_87 {dimension_numbers = #tpu.dot_dimension_numbers<[1], [0], [0], [1], [0, 0, 1, 1], [], []>} : vector<32x128xbf16>, vector<128x128xbf16>, vector<32x128xf32> -> vector<32x128xf32>
    %cst_88 = arith.constant dense<0.000000e+00> : vector<128xf32>
    %142 = vector.multi_reduction <add>, %141, %cst_88 [0] : vector<32x128xf32> to vector<128xf32>
    %143 = vector.shape_cast %142 : vector<128xf32> to vector<1x128xf32>
    %cst_89 = arith.constant 1.250000e-01 : f32
    %144 = vector.broadcast %cst_89 : f32 to vector<1x128xf32>
    %145 = arith.mulf %143, %144 : vector<1x128xf32>
    %146 = arith.mulf %141, %141 : vector<32x128xf32>
    %cst_90 = arith.constant dense<0.000000e+00> : vector<128xf32>
    %147 = vector.multi_reduction <add>, %146, %cst_90 [0] : vector<32x128xf32> to vector<128xf32>
    %148 = vector.shape_cast %147 : vector<128xf32> to vector<1x128xf32>
    %cst_91 = arith.constant 1.250000e-01 : f32
    %149 = vector.broadcast %cst_91 : f32 to vector<1x128xf32>
    %150 = arith.mulf %148, %149 : vector<1x128xf32>
    %151 = arith.mulf %145, %145 : vector<1x128xf32>
    %152 = arith.subf %150, %151 : vector<1x128xf32>
    %c2_92 = arith.constant 2 : index
    %c0_93 = arith.constant 0 : index
    %153 = vector.load %arg4[%c2_92, %c0_93] : memref<8x128xf32, #tpu.memory_space<vmem>>, vector<1x128xf32>
    %c6 = arith.constant 6 : index
    %c0_94 = arith.constant 0 : index
    %154 = vector.load %arg4[%c6, %c0_94] : memref<8x128xf32, #tpu.memory_space<vmem>>, vector<1x128xf32>
    %cst_95 = arith.constant 9.99999974E-6 : f32
    %155 = vector.broadcast %cst_95 : f32 to vector<1x128xf32>
    %156 = arith.addf %152, %155 : vector<1x128xf32>
    %157 = math.rsqrt %156 : vector<1x128xf32>
    %158 = arith.mulf %153, %157 : vector<1x128xf32>
    %159 = arith.mulf %145, %158 : vector<1x128xf32>
    %160 = arith.subf %154, %159 : vector<1x128xf32>
    %161 = vector.broadcast %158 : vector<1x128xf32> to vector<32x128xf32>
    %162 = arith.mulf %141, %161 : vector<32x128xf32>
    %163 = vector.broadcast %160 : vector<1x128xf32> to vector<32x128xf32>
    %164 = arith.addf %162, %163 : vector<32x128xf32>
    %cst_96 = arith.constant 0.000000e+00 : f32
    %165 = vector.broadcast %cst_96 : f32 to vector<32x128xf32>
    %166 = arith.cmpf oge, %164, %165 : vector<32x128xf32>
    %cst_97 = arith.constant 2.000000e-01 : f32
    %167 = vector.broadcast %cst_97 : f32 to vector<32x128xf32>
    %168 = arith.mulf %167, %164 : vector<32x128xf32>
    %169 = arith.select %166, %164, %168 : vector<32x128xi1>, vector<32x128xf32>
    %170 = arith.truncf %169 : vector<32x128xf32> to vector<32x128xbf16>
    %c4_98 = arith.constant 4 : index
    %c0_99 = arith.constant 0 : index
    %c0_100 = arith.constant 0 : index
    %171 = vector.load %arg3[%c4_98, %c0_99, %c0_100] : memref<5x128x512xbf16, #tpu.memory_space<vmem>>, vector<1x128x512xbf16>
    %172 = vector.shape_cast %171 : vector<1x128x512xbf16> to vector<128x512xbf16>
    %cst_101 = arith.constant dense<0.000000e+00> : vector<32x512xf32>
    %173 = tpu.matmul %170, %172, %cst_101 {dimension_numbers = #tpu.dot_dimension_numbers<[1], [0], [0], [1], [0, 0, 1, 1], [], []>} : vector<32x128xbf16>, vector<128x512xbf16>, vector<32x512xf32> -> vector<32x512xf32>
    %174 = vector.extract_strided_slice %173 {offsets = [0, 0], sizes = [32, 128], strides = [1, 1]} : vector<32x512xf32> to vector<32x128xf32>
    %175 = arith.truncf %174 : vector<32x128xf32> to vector<32x128xbf16>
    %c0_102 = arith.constant 0 : index
    %c0_103 = arith.constant 0 : index
    %176 = vector.load %arg6[%c0_102, %c0_103] : memref<128x128xbf16, #tpu.memory_space<vmem>>, vector<32x128xbf16>
    tpu.vector_store %arg6[%c0_102, %c0_103], %175 {strides = array<i32>} : memref<128x128xbf16, #tpu.memory_space<vmem>>, vector<32x128xbf16>,
    %177 = vector.extract_strided_slice %173 {offsets = [0, 128], sizes = [32, 128], strides = [1, 1]} : vector<32x512xf32> to vector<32x128xf32>
    %178 = arith.truncf %177 : vector<32x128xf32> to vector<32x128xbf16>
    %c32_104 = arith.constant 32 : index
    %c0_105 = arith.constant 0 : index
    %179 = vector.load %arg6[%c32_104, %c0_105] : memref<128x128xbf16, #tpu.memory_space<vmem>>, vector<32x128xbf16>
    tpu.vector_store %arg6[%c32_104, %c0_105], %178 {strides = array<i32>} : memref<128x128xbf16, #tpu.memory_space<vmem>>, vector<32x128xbf16>,
    %180 = vector.extract_strided_slice %173 {offsets = [0, 256], sizes = [32, 128], strides = [1, 1]} : vector<32x512xf32> to vector<32x128xf32>
    %181 = arith.truncf %180 : vector<32x128xf32> to vector<32x128xbf16>
    %c64_106 = arith.constant 64 : index
    %c0_107 = arith.constant 0 : index
    %182 = vector.load %arg6[%c64_106, %c0_107] : memref<128x128xbf16, #tpu.memory_space<vmem>>, vector<32x128xbf16>
    tpu.vector_store %arg6[%c64_106, %c0_107], %181 {strides = array<i32>} : memref<128x128xbf16, #tpu.memory_space<vmem>>, vector<32x128xbf16>,
    %183 = vector.extract_strided_slice %173 {offsets = [0, 384], sizes = [32, 128], strides = [1, 1]} : vector<32x512xf32> to vector<32x128xf32>
    %184 = arith.truncf %183 : vector<32x128xf32> to vector<32x128xbf16>
    %c96_108 = arith.constant 96 : index
    %c0_109 = arith.constant 0 : index
    %185 = vector.load %arg6[%c96_108, %c0_109] : memref<128x128xbf16, #tpu.memory_space<vmem>>, vector<32x128xbf16>
    tpu.vector_store %arg6[%c96_108, %c0_109], %184 {strides = array<i32>} : memref<128x128xbf16, #tpu.memory_space<vmem>>, vector<32x128xbf16>,
    %c4_110 = arith.constant 4 : index
    %c0_111 = arith.constant 0 : index
    %c0_112 = arith.constant 0 : index
    %186 = vector.load %arg2[%c4_110, %c0_111, %c0_112] : memref<5x32x128xbf16, #tpu.memory_space<vmem>>, vector<1x32x128xbf16>
    %187 = vector.shape_cast %186 : vector<1x32x128xbf16> to vector<32x128xbf16>
    %c0_113 = arith.constant 0 : index
    %c0_114 = arith.constant 0 : index
    %188 = vector.load %arg6[%c0_113, %c0_114] : memref<128x128xbf16, #tpu.memory_space<vmem>>, vector<128x128xbf16>
    %cst_115 = arith.constant dense<0.000000e+00> : vector<32x128xf32>
    %189 = tpu.matmul %187, %188, %cst_115 {dimension_numbers = #tpu.dot_dimension_numbers<[1], [0], [0], [1], [0, 0, 1, 1], [], []>} : vector<32x128xbf16>, vector<128x128xbf16>, vector<32x128xf32> -> vector<32x128xf32>
    %190 = arith.negf %189 : vector<32x128xf32>
    %191 = math.exp %190 : vector<32x128xf32>
    %cst_116 = arith.constant 1.000000e+00 : f32
    %192 = vector.broadcast %cst_116 : f32 to vector<32x128xf32>
    %193 = arith.addf %192, %191 : vector<32x128xf32>
    %194 = arith.divf %192, %193 : vector<32x128xf32>
    %c0_117 = arith.constant 0 : index
    %c0_118 = arith.constant 0 : index
    %195 = vector.load %arg5[%c0_117, %c0_118] : memref<32x128xf32, #tpu.memory_space<vmem>>, vector<32x128xf32>
    tpu.vector_store %arg5[%c0_117, %c0_118], %194 {strides = array<i32>} : memref<32x128xf32, #tpu.memory_space<vmem>>, vector<32x128xf32>,
    return
  }
  func.func @transform_0(%arg0: i32) -> (i32, i32) {
    %c0_i32 = arith.constant 0 : i32
    %c0_i32_0 = arith.constant 0 : i32
    %c0_i32_1 = arith.constant 0 : i32
    return %c0_i32, %c0_i32_0 : i32, i32
  }
  func.func @transform_1(%arg0: i32) -> (i32, i32, i32) {
    %c0_i32 = arith.constant 0 : i32
    %c0_i32_0 = arith.constant 0 : i32
    %c0_i32_1 = arith.constant 0 : i32
    %c0_i32_2 = arith.constant 0 : i32
    return %c0_i32, %c0_i32_0, %c0_i32_1 : i32, i32, i32
  }
  func.func @transform_2(%arg0: i32) -> (i32, i32, i32) {
    %c0_i32 = arith.constant 0 : i32
    %c0_i32_0 = arith.constant 0 : i32
    %c0_i32_1 = arith.constant 0 : i32
    %c0_i32_2 = arith.constant 0 : i32
    return %c0_i32, %c0_i32_0, %c0_i32_1 : i32, i32, i32
  }
  func.func @transform_3(%arg0: i32) -> (i32, i32) {
    %c0_i32 = arith.constant 0 : i32
    %c0_i32_0 = arith.constant 0 : i32
    %c0_i32_1 = arith.constant 0 : i32
    return %c0_i32, %c0_i32_0 : i32, i32
  }
  func.func @transform_4(%arg0: i32) -> (i32, i32) {
    %c0_i32 = arith.constant 0 : i32
    %c0_i32_0 = arith.constant 0 : i32
    %c0_i32_1 = arith.constant 0 : i32
    return %c0_i32, %c0_i32_0 : i32, i32
  }
}

</mosaic_0001>

<llo_original>
// kernel: forward.1
$region0: #{forward.1}
  #allocation0 [shape = 'u32[]', space=smem, size = 0x4, offset = 0x4, fixed_abs, tag = 'smem constant byte address 0x4 - core index']
  #allocation1 [shape = 'u32[144,128]{1,0:T(1,128)}', space=vmem, size = 0x12000, scoped, tag = 'internal scratch']
  #allocation2 [shape = 'bf16[128,128]{1,0:T(16,128)(2,1)}', space=vmem, size = 0x8000, scoped, tag = 'scratch operand']
  %s0 = inlined_call_operand.vmem [shape: f32[32,128], index: 0, kind: input, shape index: {}]
  %s1 = inlined_call_operand.vmem [shape: bf16[5,32,128], index: 1, kind: input, shape index: {}]
  %s2 = inlined_call_operand.hbm [shape: bf16[5,128,512], index: 2, kind: input, shape index: {}]
  %s3 = inlined_call_operand.vmem [shape: f32[8,128], index: 3, kind: input, shape index: {}]
  %s4 = inlined_call_operand.vmem [shape: f32[32,128], index: 4, kind: output, shape index: {}]
  %s5 = sld [smem:[#allocation0]]
  $region30: #{forward.1} parent=0
    _
  %s7 = ssub.s32 1, %s5
  %s8 = scalar_select 0, %s7, %s5
  $region1: #{forward.1} parent=0
    #allocation3 [shape = 'u8[655360]{0}', space=vmem, size = 0xa0000, scoped, tag = 'input window, operand 2, single buffered']
    #allocation4 [shape = 's32[1]{0}', space=sflag, size = 0x4, scoped, tag = 'scoped memory for forward.1']
    %9 = vsyncpa [#allocation4], 0
    // Predicated region
    $region2: #{forward.1} parent=1 // pred_check
      _
    $region3: #{forward.1} parent=1 // pred_check_branch
      %11 = sbr.rel (0) target = $region5
    $region4: #{forward.1} parent=1 // pred_region
      _
    $region5: #{forward.1} parent=1 // pred_fallthru
      _
    // Predicated region
    $region6: #{forward.1} parent=1 // pred_check
      _
    $region7: #{forward.1} parent=1 // pred_check_branch
      %13 = sbr.rel (0) target = $region9
    $region8: #{forward.1} parent=1 // pred_region
      _
    $region9: #{forward.1} parent=1 // pred_fallthru
      _
    // Predicated region
    $region10: #{forward.1} parent=1 // pred_check
      _
    $region11: #{forward.1} parent=1 // pred_check_branch
      %15 = sbr.rel (0) target = $region13
    $region12: #{forward.1} parent=1 // pred_region
      %s17 = ssub.s32 20480, 20480
      %18 = vsyncadd [#allocation4], %s17
      %s19 = sshll.u32 [#allocation3], 4
      %s20 = int_to_ptr.vmem [resolvable:$true] %s19
      %25 = dma.hbm_to_vmem [thread:$0]  %s2, 20480, %s20, [#allocation4], 256, 256, 16
    $region13: #{forward.1} parent=1 // pred_fallthru
      _
    // Predicated region
    $region14: #{forward.1} parent=1 // pred_check
      _
    $region15: #{forward.1} parent=1 // pred_check_branch
      %27 = sbr.rel (0) target = $region17
    $region16: #{forward.1} parent=1 // pred_region
      _
    $region17: #{forward.1} parent=1 // pred_fallthru
      _
    // Predicated region
    $region18: #{forward.1} parent=1 // pred_check
      _
    $region19: #{forward.1} parent=1 // pred_check_branch
      %29 = sbr.rel (0) target = $region21
    $region20: #{forward.1} parent=1 // pred_region
      %30 = dma.done [#allocation4], 20480
    $region21: #{forward.1} parent=1 // pred_fallthru
      _
    %v32 = vld [vmem:[%s0] sm:$0xff]
    %v33 = vld [vmem:[%s0 + $0x8] sm:$0xff]
    %v34 = vld [vmem:[%s0 + $0x10] sm:$0xff]
    %v35 = vld [vmem:[%s0 + $0x18] sm:$0xff]
    %v36 = vpack.c.bf16 %v33, %v32
    %v37 = vpack.c.bf16 %v35, %v34
    %v38 = vld [vmem:[#allocation3] sm:$0xff]
    %v39 = vld [vmem:[#allocation3 + $0x8] sm:$0xff]
    %v40 = vld [vmem:[#allocation3 + $0x10] sm:$0xff]
    %v41 = vld [vmem:[#allocation3 + $0x18] sm:$0xff]
    %v42 = vld [vmem:[#allocation3 + $0x20] sm:$0xff]
    %v43 = vld [vmem:[#allocation3 + $0x28] sm:$0xff]
    %v44 = vld [vmem:[#allocation3 + $0x30] sm:$0xff]
    %v45 = vld [vmem:[#allocation3 + $0x38] sm:$0xff]
    %v46 = vld [vmem:[#allocation3 + $0x40] sm:$0xff]
    %v47 = vld [vmem:[#allocation3 + $0x48] sm:$0xff]
    %v48 = vld [vmem:[#allocation3 + $0x50] sm:$0xff]
    %v49 = vld [vmem:[#allocation3 + $0x58] sm:$0xff]
    %v50 = vld [vmem:[#allocation3 + $0x60] sm:$0xff]
    %v51 = vld [vmem:[#allocation3 + $0x68] sm:$0xff]
    %v52 = vld [vmem:[#allocation3 + $0x70] sm:$0xff]
    %v53 = vld [vmem:[#allocation3 + $0x78] sm:$0xff]
    %v54 = vld [vmem:[#allocation3 + $0x80] sm:$0xff]
    %v55 = vld [vmem:[#allocation3 + $0x88] sm:$0xff]
    %v56 = vld [vmem:[#allocation3 + $0x90] sm:$0xff]
    %v57 = vld [vmem:[#allocation3 + $0x98] sm:$0xff]
    %v58 = vld [vmem:[#allocation3 + $0xa0] sm:$0xff]
    %v59 = vld [vmem:[#allocation3 + $0xa8] sm:$0xff]
    %v60 = vld [vmem:[#allocation3 + $0xb0] sm:$0xff]
    %v61 = vld [vmem:[#allocation3 + $0xb8] sm:$0xff]
    %v62 = vld [vmem:[#allocation3 + $0xc0] sm:$0xff]
    %v63 = vld [vmem:[#allocation3 + $0xc8] sm:$0xff]
    %v64 = vld [vmem:[#allocation3 + $0xd0] sm:$0xff]
    %v65 = vld [vmem:[#allocation3 + $0xd8] sm:$0xff]
    %v66 = vld [vmem:[#allocation3 + $0xe0] sm:$0xff]
    %v67 = vld [vmem:[#allocation3 + $0xe8] sm:$0xff]
    %v68 = vld [vmem:[#allocation3 + $0xf0] sm:$0xff]
    %v69 = vld [vmem:[#allocation3 + $0xf8] sm:$0xff]
    %v102 = vunpack.c.l.b16 %v38
    %v103 = vunpack.c.h.b16 %v38
    %v104 = vunpack.c.l.b16 %v39
    %v105 = vunpack.c.h.b16 %v39
    %v106 = vunpack.c.l.b16 %v40
    %v107 = vunpack.c.h.b16 %v40
    %v108 = vunpack.c.l.b16 %v41
    %v109 = vunpack.c.h.b16 %v41
    %v110 = vunpack.c.l.b16 %v42
    %v111 = vunpack.c.h.b16 %v42
    %v112 = vunpack.c.l.b16 %v43
    %v113 = vunpack.c.h.b16 %v43
    %v114 = vunpack.c.l.b16 %v44
    %v115 = vunpack.c.h.b16 %v44
    %v116 = vunpack.c.l.b16 %v45
    %v117 = vunpack.c.h.b16 %v45
    %v118 = vunpack.c.l.b16 %v46
    %v119 = vunpack.c.h.b16 %v46
    %v120 = vunpack.c.l.b16 %v47
    %v121 = vunpack.c.h.b16 %v47
    %v122 = vunpack.c.l.b16 %v48
    %v123 = vunpack.c.h.b16 %v48
    %v124 = vunpack.c.l.b16 %v49
    %v125 = vunpack.c.h.b16 %v49
    %v126 = vunpack.c.l.b16 %v50
    %v127 = vunpack.c.h.b16 %v50
    %v128 = vunpack.c.l.b16 %v51
    %v129 = vunpack.c.h.b16 %v51
    %v130 = vunpack.c.l.b16 %v52
    %v131 = vunpack.c.h.b16 %v52
    %v132 = vunpack.c.l.b16 %v53
    %v133 = vunpack.c.h.b16 %v53
    %v134 = vunpack.c.l.b16 %v54
    %v135 = vunpack.c.h.b16 %v54
    %v136 = vunpack.c.l.b16 %v55
    %v137 = vunpack.c.h.b16 %v55
    %v138 = vunpack.c.l.b16 %v56
    %v139 = vunpack.c.h.b16 %v56
    %v140 = vunpack.c.l.b16 %v57
    %v141 = vunpack.c.h.b16 %v57
    %v142 = vunpack.c.l.b16 %v58
    %v143 = vunpack.c.h.b16 %v58
    %v144 = vunpack.c.l.b16 %v59
    %v145 = vunpack.c.h.b16 %v59
    %v146 = vunpack.c.l.b16 %v60
    %v147 = vunpack.c.h.b16 %v60
    %v148 = vunpack.c.l.b16 %v61
    %v149 = vunpack.c.h.b16 %v61
    %v150 = vunpack.c.l.b16 %v62
    %v151 = vunpack.c.h.b16 %v62
    %v152 = vunpack.c.l.b16 %v63
    %v153 = vunpack.c.h.b16 %v63
    %v154 = vunpack.c.l.b16 %v64
    %v155 = vunpack.c.h.b16 %v64
    %v156 = vunpack.c.l.b16 %v65
    %v157 = vunpack.c.h.b16 %v65
    %v158 = vunpack.c.l.b16 %v66
    %v159 = vunpack.c.h.b16 %v66
    %v160 = vunpack.c.l.b16 %v67
    %v161 = vunpack.c.h.b16 %v67
    %v162 = vunpack.c.l.b16 %v68
    %v163 = vunpack.c.h.b16 %v68
    %v164 = vunpack.c.l.b16 %v69
    %v165 = vunpack.c.h.b16 %v69
    %v166 = vpack.c.b16 %v106, %v102
    %v167 = vpack.c.b16 %v107, %v103
    %v168 = vpack.c.b16 %v108, %v104
    %v169 = vpack.c.b16 %v109, %v105
    %v170 = vpack.c.b16 %v114, %v110
    %v171 = vpack.c.b16 %v115, %v111
    %v172 = vpack.c.b16 %v116, %v112
    %v173 = vpack.c.b16 %v117, %v113
    %v174 = vpack.c.b16 %v122, %v118
    %v175 = vpack.c.b16 %v123, %v119
    %v176 = vpack.c.b16 %v124, %v120
    %v177 = vpack.c.b16 %v125, %v121
    %v178 = vpack.c.b16 %v130, %v126
    %v179 = vpack.c.b16 %v131, %v127
    %v180 = vpack.c.b16 %v132, %v128
    %v181 = vpack.c.b16 %v133, %v129
    %v182 = vpack.c.b16 %v138, %v134
    %v183 = vpack.c.b16 %v139, %v135
    %v184 = vpack.c.b16 %v140, %v136
    %v185 = vpack.c.b16 %v141, %v137
    %v186 = vpack.c.b16 %v146, %v142
    %v187 = vpack.c.b16 %v147, %v143
    %v188 = vpack.c.b16 %v148, %v144
    %v189 = vpack.c.b16 %v149, %v145
    %v190 = vpack.c.b16 %v154, %v150
    %v191 = vpack.c.b16 %v155, %v151
    %v192 = vpack.c.b16 %v156, %v152
    %v193 = vpack.c.b16 %v157, %v153
    %v194 = vpack.c.b16 %v162, %v158
    %v195 = vpack.c.b16 %v163, %v159
    %v196 = vpack.c.b16 %v164, %v160
    %v197 = vpack.c.b16 %v165, %v161
    %230 = vmatprep.subr.bf16.mxu0 %v167
    %231 = vmatpush1.bf16.msra.mxu0 %v166
    %232 = vmatprep.subr.bf16.mxu0 %v171
    %233 = vmatpush1.bf16.msra.mxu0 %v170
    %234 = vmatprep.subr.bf16.mxu0 %v175
    %235 = vmatpush1.bf16.msra.mxu0 %v174
    %236 = vmatprep.subr.bf16.mxu0 %v179
    %237 = vmatpush1.bf16.msra.mxu0 %v178
    %238 = vmatprep.subr.bf16.mxu0 %v183
    %239 = vmatpush1.bf16.msra.mxu0 %v182
    %240 = vmatprep.subr.bf16.mxu0 %v187
    %241 = vmatpush1.bf16.msra.mxu0 %v186
    %242 = vmatprep.subr.bf16.mxu0 %v191
    %243 = vmatpush1.bf16.msra.mxu0 %v190
    %244 = vmatprep.subr.bf16.mxu0 %v195
    %245 = vmatpush1.bf16.msra.mxu0 %v194
    %246 = vmatprep.subr.bf16.mxu0 0
    %247 = vmatpush1.bf16.msra.mxu0 0
    %248 = vmatprep.subr.bf16.mxu0 0
    %249 = vmatpush1.bf16.msra.mxu0 0
    %250 = vmatprep.subr.bf16.mxu0 0
    %251 = vmatpush1.bf16.msra.mxu0 0
    %252 = vmatprep.subr.bf16.mxu0 0
    %253 = vmatpush1.bf16.msra.mxu0 0
    %254 = vmatprep.subr.bf16.mxu0 0
    %255 = vmatpush1.bf16.msra.mxu0 0
    %256 = vmatprep.subr.bf16.mxu0 0
    %257 = vmatpush1.bf16.msra.mxu0 0
    %258 = vmatprep.subr.bf16.mxu0 0
    %259 = vmatpush1.bf16.msra.mxu0 0
    %260 = vmatprep.subr.bf16.mxu0 0
    %261 = vmatpush1.bf16.msra.mxu0 0
    %262 = vmatprep.mubr.bf16.mxu0 0
    %263 = vmatmul.mubr.bf16.gmra.mrb[0].mxu0 %v36
    %v264 = vpop.f32.mrb[0].mxu0
    %v265 = vadd.f32 0.0, %v264
    %v266 = vpop.f32.mrb[0].mxu0
    %v267 = vadd.f32 0.0, %v266
    %v268 = vpop.f32.mrb[0].mxu0
    %v269 = vadd.f32 0.0, %v268
    %v270 = vpop.f32.mrb[0].mxu0
    %v271 = vadd.f32 0.0, %v270
    %272 = vmatprep.mubr.bf16.mxu0 0
    %273 = vmatmul.mubr.bf16.gmra.mrb[0].mxu0 %v37
    %v274 = vpop.f32.mrb[0].mxu0
    %v275 = vadd.f32 0.0, %v274
    %v276 = vpop.f32.mrb[0].mxu0
    %v277 = vadd.f32 0.0, %v276
    %v278 = vpop.f32.mrb[0].mxu0
    %v279 = vadd.f32 0.0, %v278
    %v280 = vpop.f32.mrb[0].mxu0
    %v281 = vadd.f32 0.0, %v280
    %282 = vdwg.mxu0
    %283 = vmatprep.subr.bf16.mxu0 %v169
    %284 = vmatpush1.bf16.msra.mxu0 %v168
    %285 = vmatprep.subr.bf16.mxu0 %v173
    %286 = vmatpush1.bf16.msra.mxu0 %v172
    %287 = vmatprep.subr.bf16.mxu0 %v177
    %288 = vmatpush1.bf16.msra.mxu0 %v176
    %289 = vmatprep.subr.bf16.mxu0 %v181
    %290 = vmatpush1.bf16.msra.mxu0 %v180
    %291 = vmatprep.subr.bf16.mxu0 %v185
    %292 = vmatpush1.bf16.msra.mxu0 %v184
    %293 = vmatprep.subr.bf16.mxu0 %v189
    %294 = vmatpush1.bf16.msra.mxu0 %v188
    %295 = vmatprep.subr.bf16.mxu0 %v193
    %296 = vmatpush1.bf16.msra.mxu0 %v192
    %297 = vmatprep.subr.bf16.mxu0 %v197
    %298 = vmatpush1.bf16.msra.mxu0 %v196
    %299 = vmatprep.subr.bf16.mxu0 0
    %300 = vmatpush1.bf16.msra.mxu0 0
    %301 = vmatprep.subr.bf16.mxu0 0
    %302 = vmatpush1.bf16.msra.mxu0 0
    %303 = vmatprep.subr.bf16.mxu0 0
    %304 = vmatpush1.bf16.msra.mxu0 0
    %305 = vmatprep.subr.bf16.mxu0 0
    %306 = vmatpush1.bf16.msra.mxu0 0
    %307 = vmatprep.subr.bf16.mxu0 0
    %308 = vmatpush1.bf16.msra.mxu0 0
    %309 = vmatprep.subr.bf16.mxu0 0
    %310 = vmatpush1.bf16.msra.mxu0 0
    %311 = vmatprep.subr.bf16.mxu0 0
    %312 = vmatpush1.bf16.msra.mxu0 0
    %313 = vmatprep.subr.bf16.mxu0 0
    %314 = vmatpush1.bf16.msra.mxu0 0
    %315 = vmatprep.mubr.bf16.mxu0 0
    %316 = vmatmul.mubr.bf16.gmra.mrb[0].mxu0 %v36
    %v317 = vpop.f32.mrb[0].mxu0
    %v318 = vadd.f32 0.0, %v317
    %v319 = vpop.f32.mrb[0].mxu0
    %v320 = vadd.f32 0.0, %v319
    %v321 = vpop.f32.mrb[0].mxu0
    %v322 = vadd.f32 0.0, %v321
    %v323 = vpop.f32.mrb[0].mxu0
    %v324 = vadd.f32 0.0, %v323
    %325 = vmatprep.mubr.bf16.mxu0 0
    %326 = vmatmul.mubr.bf16.gmra.mrb[0].mxu0 %v37
    %v327 = vpop.f32.mrb[0].mxu0
    %v328 = vadd.f32 0.0, %v327
    %v329 = vpop.f32.mrb[0].mxu0
    %v330 = vadd.f32 0.0, %v329
    %v331 = vpop.f32.mrb[0].mxu0
    %v332 = vadd.f32 0.0, %v331
    %v333 = vpop.f32.mrb[0].mxu0
    %v334 = vadd.f32 0.0, %v333
    %335 = vdwg.mxu0
    %v336 = vpack.c.bf16 %v269, %v265
    %v337 = vpack.c.bf16 %v279, %v275
    %338 = vst [vmem:[#allocation2] sm:$0xff] %v336
    %339 = vst [vmem:[#allocation2 + $0x8] sm:$0xff] %v337
    %v340 = vpack.c.bf16 %v271, %v267
    %v341 = vpack.c.bf16 %v281, %v277
    %342 = vst [vmem:[#allocation2 + $0x10] sm:$0xff] %v340
    %343 = vst [vmem:[#allocation2 + $0x18] sm:$0xff] %v341
    %v344 = vpack.c.bf16 %v322, %v318
    %v345 = vpack.c.bf16 %v332, %v328
    %346 = vst [vmem:[#allocation2 + $0x20] sm:$0xff] %v344
    %347 = vst [vmem:[#allocation2 + $0x28] sm:$0xff] %v345
    %v348 = vpack.c.bf16 %v324, %v320
    %v349 = vpack.c.bf16 %v334, %v330
    %350 = vst [vmem:[#allocation2 + $0x30] sm:$0xff] %v348
    %351 = vst [vmem:[#allocation2 + $0x38] sm:$0xff] %v349
    %v352 = vld [vmem:[%s1] sm:$0xf]
    %v353 = vld [vmem:[%s1 + $0x4] sm:$0xf]
    %v354 = vld [vmem:[%s1 + $0x8] sm:$0xf]
    %v355 = vld [vmem:[%s1 + $0xc] sm:$0xf]
    %v356 = vld [vmem:[#allocation2] sm:$0xff]
    %v357 = vld [vmem:[#allocation2 + $0x8] sm:$0xff]
    %v358 = vld [vmem:[#allocation2 + $0x10] sm:$0xff]
    %v359 = vld [vmem:[#allocation2 + $0x18] sm:$0xff]
    %v360 = vld [vmem:[#allocation2 + $0x20] sm:$0xff]
    %v361 = vld [vmem:[#allocation2 + $0x28] sm:$0xff]
    %v362 = vld [vmem:[#allocation2 + $0x30] sm:$0xff]
    %v363 = vld [vmem:[#allocation2 + $0x38] sm:$0xff]
    %v368 = vunpack.c.l.b16 %v352
    %v369 = vunpack.c.l.b16 %v353
    %v370 = vunpack.c.l.b16 %v354
    %v371 = vunpack.c.l.b16 %v355
    %v372 = vpack.c.b16 %v369, %v368
    %v373 = vpack.c.b16 %v371, %v370
    %376 = vmatprep.subr.bf16.mxu0 0
    %377 = vmatpush1.bf16.msra.mxu0 %v356
    %378 = vmatprep.subr.bf16.mxu0 0
    %379 = vmatpush1.bf16.msra.mxu0 %v357
    %380 = vmatprep.subr.bf16.mxu0 0
    %381 = vmatpush1.bf16.msra.mxu0 %v358
    %382 = vmatprep.subr.bf16.mxu0 0
    %383 = vmatpush1.bf16.msra.mxu0 %v359
    %384 = vmatprep.subr.bf16.mxu0 0
    %385 = vmatpush1.bf16.msra.mxu0 %v360
    %386 = vmatprep.subr.bf16.mxu0 0
    %387 = vmatpush1.bf16.msra.mxu0 %v361
    %388 = vmatprep.subr.bf16.mxu0 0
    %389 = vmatpush1.bf16.msra.mxu0 %v362
    %390 = vmatprep.subr.bf16.mxu0 0
    %391 = vmatpush1.bf16.msra.mxu0 %v363
    %392 = vmatprep.subr.bf16.mxu0 0
    %393 = vmatpush1.bf16.msra.mxu0 0
    %394 = vmatprep.subr.bf16.mxu0 0
    %395 = vmatpush1.bf16.msra.mxu0 0
    %396 = vmatprep.subr.bf16.mxu0 0
    %397 = vmatpush1.bf16.msra.mxu0 0
    %398 = vmatprep.subr.bf16.mxu0 0
    %399 = vmatpush1.bf16.msra.mxu0 0
    %400 = vmatprep.subr.bf16.mxu0 0
    %401 = vmatpush1.bf16.msra.mxu0 0
    %402 = vmatprep.subr.bf16.mxu0 0
    %403 = vmatpush1.bf16.msra.mxu0 0
    %404 = vmatprep.subr.bf16.mxu0 0
    %405 = vmatpush1.bf16.msra.mxu0 0
    %406 = vmatprep.subr.bf16.mxu0 0
    %407 = vmatpush1.bf16.msra.mxu0 0
    %408 = vmatprep.mubr.bf16.mxu0 0
    %409 = vmatmul.mubr.bf16.gmra.mrb[0].mxu0 %v372
    %v410 = vpop.f32.mrb[0].mxu0
    %v411 = vadd.f32 0.0, %v410
    %v412 = vpop.f32.mrb[0].mxu0
    %v413 = vpop.f32.mrb[0].mxu0
    %v414 = vadd.f32 0.0, %v413
    %v415 = vpop.f32.mrb[0].mxu0
    %416 = vmatprep.mubr.bf16.mxu0 0
    %417 = vmatmul.mubr.bf16.gmra.mrb[0].mxu0 %v373
    %v418 = vpop.f32.mrb[0].mxu0
    %v419 = vadd.f32 0.0, %v418
    %v420 = vpop.f32.mrb[0].mxu0
    %v421 = vpop.f32.mrb[0].mxu0
    %v422 = vadd.f32 0.0, %v421
    %v423 = vpop.f32.mrb[0].mxu0
    %424 = vdwg.mxu0
    %vm425 = vcmp.ge.f32.partialorder %v411, 0.0
    %vm426 = vcmp.ge.f32.partialorder %v414, 0.0
    %vm427 = vcmp.ge.f32.partialorder %v419, 0.0
    %vm428 = vcmp.ge.f32.partialorder %v422, 0.0
    %v429 = vmul.f32 %v411, 0.2
    %v430 = vmul.f32 %v414, 0.2
    %v431 = vmul.f32 %v419, 0.2
    %v432 = vmul.f32 %v422, 0.2
    %v433 = vsel %vm425, %v411, %v429
    %v434 = vsel %vm426, %v414, %v430
    %v435 = vsel %vm427, %v419, %v431
    %v436 = vsel %vm428, %v422, %v432
    %v437 = vpack.c.bf16 %v434, %v433
    %v438 = vpack.c.bf16 %v436, %v435
    %s439 = scalar_lea.vmem [#allocation3], 256
    %v440 = vld [vmem:[%s439] sm:$0xff]
    %v441 = vld [vmem:[%s439 + $0x8] sm:$0xff]
    %v442 = vld [vmem:[%s439 + $0x10] sm:$0xff]
    %v443 = vld [vmem:[%s439 + $0x18] sm:$0xff]
    %v444 = vld [vmem:[%s439 + $0x20] sm:$0xff]
    %v445 = vld [vmem:[%s439 + $0x28] sm:$0xff]
    %v446 = vld [vmem:[%s439 + $0x30] sm:$0xff]
    %v447 = vld [vmem:[%s439 + $0x38] sm:$0xff]
    %v448 = vld [vmem:[%s439 + $0x40] sm:$0xff]
    %v449 = vld [vmem:[%s439 + $0x48] sm:$0xff]
    %v450 = vld [vmem:[%s439 + $0x50] sm:$0xff]
    %v451 = vld [vmem:[%s439 + $0x58] sm:$0xff]
    %v452 = vld [vmem:[%s439 + $0x60] sm:$0xff]
    %v453 = vld [vmem:[%s439 + $0x68] sm:$0xff]
    %v454 = vld [vmem:[%s439 + $0x70] sm:$0xff]
    %v455 = vld [vmem:[%s439 + $0x78] sm:$0xff]
    %v456 = vld [vmem:[%s439 + $0x80] sm:$0xff]
    %v457 = vld [vmem:[%s439 + $0x88] sm:$0xff]
    %v458 = vld [vmem:[%s439 + $0x90] sm:$0xff]
    %v459 = vld [vmem:[%s439 + $0x98] sm:$0xff]
    %v460 = vld [vmem:[%s439 + $0xa0] sm:$0xff]
    %v461 = vld [vmem:[%s439 + $0xa8] sm:$0xff]
    %v462 = vld [vmem:[%s439 + $0xb0] sm:$0xff]
    %v463 = vld [vmem:[%s439 + $0xb8] sm:$0xff]
    %v464 = vld [vmem:[%s439 + $0xc0] sm:$0xff]
    %v465 = vld [vmem:[%s439 + $0xc8] sm:$0xff]
    %v466 = vld [vmem:[%s439 + $0xd0] sm:$0xff]
    %v467 = vld [vmem:[%s439 + $0xd8] sm:$0xff]
    %v468 = vld [vmem:[%s439 + $0xe0] sm:$0xff]
    %v469 = vld [vmem:[%s439 + $0xe8] sm:$0xff]
    %v470 = vld [vmem:[%s439 + $0xf0] sm:$0xff]
    %v471 = vld [vmem:[%s439 + $0xf8] sm:$0xff]
    %v504 = vunpack.c.l.b16 %v440
    %v505 = vunpack.c.h.b16 %v440
    %v506 = vunpack.c.l.b16 %v441
    %v507 = vunpack.c.h.b16 %v441
    %v508 = vunpack.c.l.b16 %v442
    %v509 = vunpack.c.h.b16 %v442
    %v510 = vunpack.c.l.b16 %v443
    %v511 = vunpack.c.h.b16 %v443
    %v512 = vunpack.c.l.b16 %v444
    %v513 = vunpack.c.h.b16 %v444
    %v514 = vunpack.c.l.b16 %v445
    %v515 = vunpack.c.h.b16 %v445
    %v516 = vunpack.c.l.b16 %v446
    %v517 = vunpack.c.h.b16 %v446
    %v518 = vunpack.c.l.b16 %v447
    %v519 = vunpack.c.h.b16 %v447
    %v520 = vunpack.c.l.b16 %v448
    %v521 = vunpack.c.h.b16 %v448
    %v522 = vunpack.c.l.b16 %v449
    %v523 = vunpack.c.h.b16 %v449
    %v524 = vunpack.c.l.b16 %v450
    %v525 = vunpack.c.h.b16 %v450
    %v526 = vunpack.c.l.b16 %v451
    %v527 = vunpack.c.h.b16 %v451
    %v528 = vunpack.c.l.b16 %v452
    %v529 = vunpack.c.h.b16 %v452
    %v530 = vunpack.c.l.b16 %v453
    %v531 = vunpack.c.h.b16 %v453
    %v532 = vunpack.c.l.b16 %v454
    %v533 = vunpack.c.h.b16 %v454
    %v534 = vunpack.c.l.b16 %v455
    %v535 = vunpack.c.h.b16 %v455
    %v536 = vunpack.c.l.b16 %v456
    %v537 = vunpack.c.h.b16 %v456
    %v538 = vunpack.c.l.b16 %v457
    %v539 = vunpack.c.h.b16 %v457
    %v540 = vunpack.c.l.b16 %v458
    %v541 = vunpack.c.h.b16 %v458
    %v542 = vunpack.c.l.b16 %v459
    %v543 = vunpack.c.h.b16 %v459
    %v544 = vunpack.c.l.b16 %v460
    %v545 = vunpack.c.h.b16 %v460
    %v546 = vunpack.c.l.b16 %v461
    %v547 = vunpack.c.h.b16 %v461
    %v548 = vunpack.c.l.b16 %v462
    %v549 = vunpack.c.h.b16 %v462
    %v550 = vunpack.c.l.b16 %v463
    %v551 = vunpack.c.h.b16 %v463
    %v552 = vunpack.c.l.b16 %v464
    %v553 = vunpack.c.h.b16 %v464
    %v554 = vunpack.c.l.b16 %v465
    %v555 = vunpack.c.h.b16 %v465
    %v556 = vunpack.c.l.b16 %v466
    %v557 = vunpack.c.h.b16 %v466
    %v558 = vunpack.c.l.b16 %v467
    %v559 = vunpack.c.h.b16 %v467
    %v560 = vunpack.c.l.b16 %v468
    %v561 = vunpack.c.h.b16 %v468
    %v562 = vunpack.c.l.b16 %v469
    %v563 = vunpack.c.h.b16 %v469
    %v564 = vunpack.c.l.b16 %v470
    %v565 = vunpack.c.h.b16 %v470
    %v566 = vunpack.c.l.b16 %v471
    %v567 = vunpack.c.h.b16 %v471
    %v568 = vpack.c.b16 %v508, %v504
    %v569 = vpack.c.b16 %v509, %v505
    %v570 = vpack.c.b16 %v510, %v506
    %v571 = vpack.c.b16 %v511, %v507
    %v572 = vpack.c.b16 %v516, %v512
    %v573 = vpack.c.b16 %v517, %v513
    %v574 = vpack.c.b16 %v518, %v514
    %v575 = vpack.c.b16 %v519, %v515
    %v576 = vpack.c.b16 %v524, %v520
    %v577 = vpack.c.b16 %v525, %v521
    %v578 = vpack.c.b16 %v526, %v522
    %v579 = vpack.c.b16 %v527, %v523
    %v580 = vpack.c.b16 %v532, %v528
    %v581 = vpack.c.b16 %v533, %v529
    %v582 = vpack.c.b16 %v534, %v530
    %v583 = vpack.c.b16 %v535, %v531
    %v584 = vpack.c.b16 %v540, %v536
    %v585 = vpack.c.b16 %v541, %v537
    %v586 = vpack.c.b16 %v542, %v538
    %v587 = vpack.c.b16 %v543, %v539
    %v588 = vpack.c.b16 %v548, %v544
    %v589 = vpack.c.b16 %v549, %v545
    %v590 = vpack.c.b16 %v550, %v546
    %v591 = vpack.c.b16 %v551, %v547
    %v592 = vpack.c.b16 %v556, %v552
    %v593 = vpack.c.b16 %v557, %v553
    %v594 = vpack.c.b16 %v558, %v554
    %v595 = vpack.c.b16 %v559, %v555
    %v596 = vpack.c.b16 %v564, %v560
    %v597 = vpack.c.b16 %v565, %v561
    %v598 = vpack.c.b16 %v566, %v562
    %v599 = vpack.c.b16 %v567, %v563
    %632 = vmatprep.subr.bf16.mxu0 %v569
    %633 = vmatpush1.bf16.msra.mxu0 %v568
    %634 = vmatprep.subr.bf16.mxu0 %v573
    %635 = vmatpush1.bf16.msra.mxu0 %v572
    %636 = vmatprep.subr.bf16.mxu0 %v577
    %637 = vmatpush1.bf16.msra.mxu0 %v576
    %638 = vmatprep.subr.bf16.mxu0 %v581
    %639 = vmatpush1.bf16.msra.mxu0 %v580
    %640 = vmatprep.subr.bf16.mxu0 %v585
    %641 = vmatpush1.bf16.msra.mxu0 %v584
    %642 = vmatprep.subr.bf16.mxu0 %v589
    %643 = vmatpush1.bf16.msra.mxu0 %v588
    %644 = vmatprep.subr.bf16.mxu0 %v593
    %645 = vmatpush1.bf16.msra.mxu0 %v592
    %646 = vmatprep.subr.bf16.mxu0 %v597
    %647 = vmatpush1.bf16.msra.mxu0 %v596
    %648 = vmatprep.subr.bf16.mxu0 0
    %649 = vmatpush1.bf16.msra.mxu0 0
    %650 = vmatprep.subr.bf16.mxu0 0
    %651 = vmatpush1.bf16.msra.mxu0 0
    %652 = vmatprep.subr.bf16.mxu0 0
    %653 = vmatpush1.bf16.msra.mxu0 0
    %654 = vmatprep.subr.bf16.mxu0 0
    %655 = vmatpush1.bf16.msra.mxu0 0
    %656 = vmatprep.subr.bf16.mxu0 0
    %657 = vmatpush1.bf16.msra.mxu0 0
    %658 = vmatprep.subr.bf16.mxu0 0
    %659 = vmatpush1.bf16.msra.mxu0 0
    %660 = vmatprep.subr.bf16.mxu0 0
    %661 = vmatpush1.bf16.msra.mxu0 0
    %662 = vmatprep.subr.bf16.mxu0 0
    %663 = vmatpush1.bf16.msra.mxu0 0
    %664 = vmatprep.mubr.bf16.mxu0 0
    %665 = vmatmul.mubr.bf16.gmra.mrb[0].mxu0 %v437
    %v666 = vpop.f32.mrb[0].mxu0
    %v667 = vadd.f32 0.0, %v666
    %v668 = vpop.f32.mrb[0].mxu0
    %v669 = vadd.f32 0.0, %v668
    %v670 = vpop.f32.mrb[0].mxu0
    %v671 = vadd.f32 0.0, %v670
    %v672 = vpop.f32.mrb[0].mxu0
    %v673 = vadd.f32 0.0, %v672
    %674 = vmatprep.mubr.bf16.mxu0 0
    %675 = vmatmul.mubr.bf16.gmra.mrb[0].mxu0 %v438
    %v676 = vpop.f32.mrb[0].mxu0
    %v677 = vadd.f32 0.0, %v676
    %v678 = vpop.f32.mrb[0].mxu0
    %v679 = vadd.f32 0.0, %v678
    %v680 = vpop.f32.mrb[0].mxu0
    %v681 = vadd.f32 0.0, %v680
    %v682 = vpop.f32.mrb[0].mxu0
    %v683 = vadd.f32 0.0, %v682
    %684 = vdwg.mxu0
    %685 = vmatprep.subr.bf16.mxu0 %v571
    %686 = vmatpush1.bf16.msra.mxu0 %v570
    %687 = vmatprep.subr.bf16.mxu0 %v575
    %688 = vmatpush1.bf16.msra.mxu0 %v574
    %689 = vmatprep.subr.bf16.mxu0 %v579
    %690 = vmatpush1.bf16.msra.mxu0 %v578
    %691 = vmatprep.subr.bf16.mxu0 %v583
    %692 = vmatpush1.bf16.msra.mxu0 %v582
    %693 = vmatprep.subr.bf16.mxu0 %v587
    %694 = vmatpush1.bf16.msra.mxu0 %v586
    %695 = vmatprep.subr.bf16.mxu0 %v591
    %696 = vmatpush1.bf16.msra.mxu0 %v590
    %697 = vmatprep.subr.bf16.mxu0 %v595
    %698 = vmatpush1.bf16.msra.mxu0 %v594
    %699 = vmatprep.subr.bf16.mxu0 %v599
    %700 = vmatpush1.bf16.msra.mxu0 %v598
    %701 = vmatprep.subr.bf16.mxu0 0
    %702 = vmatpush1.bf16.msra.mxu0 0
    %703 = vmatprep.subr.bf16.mxu0 0
    %704 = vmatpush1.bf16.msra.mxu0 0
    %705 = vmatprep.subr.bf16.mxu0 0
    %706 = vmatpush1.bf16.msra.mxu0 0
    %707 = vmatprep.subr.bf16.mxu0 0
    %708 = vmatpush1.bf16.msra.mxu0 0
    %709 = vmatprep.subr.bf16.mxu0 0
    %710 = vmatpush1.bf16.msra.mxu0 0
    %711 = vmatprep.subr.bf16.mxu0 0
    %712 = vmatpush1.bf16.msra.mxu0 0
    %713 = vmatprep.subr.bf16.mxu0 0
    %714 = vmatpush1.bf16.msra.mxu0 0
    %715 = vmatprep.subr.bf16.mxu0 0
    %716 = vmatpush1.bf16.msra.mxu0 0
    %717 = vmatprep.mubr.bf16.mxu0 0
    %718 = vmatmul.mubr.bf16.gmra.mrb[0].mxu0 %v437
    %v719 = vpop.f32.mrb[0].mxu0
    %v720 = vadd.f32 0.0, %v719
    %v721 = vpop.f32.mrb[0].mxu0
    %v722 = vadd.f32 0.0, %v721
    %v723 = vpop.f32.mrb[0].mxu0
    %v724 = vadd.f32 0.0, %v723
    %v725 = vpop.f32.mrb[0].mxu0
    %v726 = vadd.f32 0.0, %v725
    %727 = vmatprep.mubr.bf16.mxu0 0
    %728 = vmatmul.mubr.bf16.gmra.mrb[0].mxu0 %v438
    %v729 = vpop.f32.mrb[0].mxu0
    %v730 = vadd.f32 0.0, %v729
    %v731 = vpop.f32.mrb[0].mxu0
    %v732 = vadd.f32 0.0, %v731
    %v733 = vpop.f32.mrb[0].mxu0
    %v734 = vadd.f32 0.0, %v733
    %v735 = vpop.f32.mrb[0].mxu0
    %v736 = vadd.f32 0.0, %v735
    %737 = vdwg.mxu0
    %v738 = vpack.c.bf16 %v671, %v667
    %v739 = vpack.c.bf16 %v681, %v677
    %740 = vst [vmem:[#allocation2] sm:$0xff] %v738
    %741 = vst [vmem:[#allocation2 + $0x8] sm:$0xff] %v739
    %v742 = vpack.c.bf16 %v673, %v669
    %v743 = vpack.c.bf16 %v683, %v679
    %744 = vst [vmem:[#allocation2 + $0x10] sm:$0xff] %v742
    %745 = vst [vmem:[#allocation2 + $0x18] sm:$0xff] %v743
    %v746 = vpack.c.bf16 %v724, %v720
    %v747 = vpack.c.bf16 %v734, %v730
    %748 = vst [vmem:[#allocation2 + $0x20] sm:$0xff] %v746
    %749 = vst [vmem:[#allocation2 + $0x28] sm:$0xff] %v747
    %v750 = vpack.c.bf16 %v726, %v722
    %v751 = vpack.c.bf16 %v736, %v732
    %752 = vst [vmem:[#allocation2 + $0x30] sm:$0xff] %v750
    %753 = vst [vmem:[#allocation2 + $0x38] sm:$0xff] %v751
    %s754 = scalar_lea.vmem %s1, 16
    %v755 = vld [vmem:[%s754] sm:$0xf]
    %v756 = vld [vmem:[%s754 + $0x4] sm:$0xf]
    %v757 = vld [vmem:[%s754 + $0x8] sm:$0xf]
    %v758 = vld [vmem:[%s754 + $0xc] sm:$0xf]
    %v759 = vld [vmem:[#allocation2] sm:$0xff]
    %v760 = vld [vmem:[#allocation2 + $0x8] sm:$0xff]
    %v761 = vld [vmem:[#allocation2 + $0x10] sm:$0xff]
    %v762 = vld [vmem:[#allocation2 + $0x18] sm:$0xff]
    %v763 = vld [vmem:[#allocation2 + $0x20] sm:$0xff]
    %v764 = vld [vmem:[#allocation2 + $0x28] sm:$0xff]
    %v765 = vld [vmem:[#allocation2 + $0x30] sm:$0xff]
    %v766 = vld [vmem:[#allocation2 + $0x38] sm:$0xff]
    %v771 = vunpack.c.l.b16 %v755
    %v772 = vunpack.c.l.b16 %v756
    %v773 = vunpack.c.l.b16 %v757
    %v774 = vunpack.c.l.b16 %v758
    %v775 = vpack.c.b16 %v772, %v771
    %v776 = vpack.c.b16 %v774, %v773
    %779 = vmatprep.subr.bf16.mxu0 0
    %780 = vmatpush1.bf16.msra.mxu0 %v759
    %781 = vmatprep.subr.bf16.mxu0 0
    %782 = vmatpush1.bf16.msra.mxu0 %v760
    %783 = vmatprep.subr.bf16.mxu0 0
    %784 = vmatpush1.bf16.msra.mxu0 %v761
    %785 = vmatprep.subr.bf16.mxu0 0
    %786 = vmatpush1.bf16.msra.mxu0 %v762
    %787 = vmatprep.subr.bf16.mxu0 0
    %788 = vmatpush1.bf16.msra.mxu0 %v763
    %789 = vmatprep.subr.bf16.mxu0 0
    %790 = vmatpush1.bf16.msra.mxu0 %v764
    %791 = vmatprep.subr.bf16.mxu0 0
    %792 = vmatpush1.bf16.msra.mxu0 %v765
    %793 = vmatprep.subr.bf16.mxu0 0
    %794 = vmatpush1.bf16.msra.mxu0 %v766
    %795 = vmatprep.subr.bf16.mxu0 0
    %796 = vmatpush1.bf16.msra.mxu0 0
    %797 = vmatprep.subr.bf16.mxu0 0
    %798 = vmatpush1.bf16.msra.mxu0 0
    %799 = vmatprep.subr.bf16.mxu0 0
    %800 = vmatpush1.bf16.msra.mxu0 0
    %801 = vmatprep.subr.bf16.mxu0 0
    %802 = vmatpush1.bf16.msra.mxu0 0
    %803 = vmatprep.subr.bf16.mxu0 0
    %804 = vmatpush1.bf16.msra.mxu0 0
    %805 = vmatprep.subr.bf16.mxu0 0
    %806 = vmatpush1.bf16.msra.mxu0 0
    %807 = vmatprep.subr.bf16.mxu0 0
    %808 = vmatpush1.bf16.msra.mxu0 0
    %809 = vmatprep.subr.bf16.mxu0 0
    %810 = vmatpush1.bf16.msra.mxu0 0
    %811 = vmatprep.mubr.bf16.mxu0 0
    %812 = vmatmul.mubr.bf16.gmra.mrb[0].mxu0 %v775
    %v813 = vpop.f32.mrb[0].mxu0
    %v814 = vadd.f32 0.0, %v813
    %v815 = vpop.f32.mrb[0].mxu0
    %v816 = vpop.f32.mrb[0].mxu0
    %v817 = vadd.f32 0.0, %v816
    %v818 = vpop.f32.mrb[0].mxu0
    %819 = vmatprep.mubr.bf16.mxu0 0
    %820 = vmatmul.mubr.bf16.gmra.mrb[0].mxu0 %v776
    %v821 = vpop.f32.mrb[0].mxu0
    %v822 = vadd.f32 0.0, %v821
    %v823 = vpop.f32.mrb[0].mxu0
    %v824 = vpop.f32.mrb[0].mxu0
    %v825 = vadd.f32 0.0, %v824
    %v826 = vpop.f32.mrb[0].mxu0
    %827 = vdwg.mxu0
    %v828 = vadd.f32 %v814, %v817
    %v829 = vadd.f32 %v828, %v822
    %v830 = vadd.f32 %v829, %v825
    %v831 = vrot.slane %v830, 4
    %v832 = vadd.f32 %v830, %v831
    %v833 = vrot.slane %v832, 2
    %v834 = vadd.f32 %v832, %v833
    %v835 = vrot.slane %v834, 1
    %v836 = vadd.f32 %v834, %v835
    %v837 = vmul.f32 %v836, 0.1
    %v838 = vmul.f32 %v814, %v814
    %v839 = vmul.f32 %v817, %v817
    %v840 = vmul.f32 %v822, %v822
    %v841 = vmul.f32 %v825, %v825
    %v842 = vadd.f32 %v838, %v839
    %v843 = vadd.f32 %v842, %v840
    %v844 = vadd.f32 %v843, %v841
    %v845 = vrot.slane %v844, 4
    %v846 = vadd.f32 %v844, %v845
    %v847 = vrot.slane %v846, 2
    %v848 = vadd.f32 %v846, %v847
    %v849 = vrot.slane %v848, 1
    %v850 = vadd.f32 %v848, %v849
    %v851 = vmul.f32 %v850, 0.1
    %v852 = vmul.f32 %v837, %v837
    %v853 = vsub.f32 %v851, %v852
    %v854 = vld [vmem:[%s3] sm:$0x1]
    %v855 = vld [vmem:[%s3 + $0x4] sm:$0x1]
    %v856 = vadd.f32 %v853, 1e-05
    %v857 = vrsqrt.pop %v856
    %v858 = vmul.f32 %v854, %v857
    %v859 = vmul.f32 %v837, %v858
    %v860 = vsub.f32 %v855, %v859
    %v861 = vlaneseq
    %v862 = vshrl.u32 %v861, 7
    %v863 = vsub.s32 0, %v862
    %v864 = vrot.slane %v858, %v863
    %v865 = vmul.f32 %v814, %v864
    %v866 = vmul.f32 %v817, %v864
    %v867 = vmul.f32 %v822, %v864
    %v868 = vmul.f32 %v825, %v864
    %v869 = vlaneseq
    %v870 = vshrl.u32 %v869, 7
    %v871 = vsub.s32 0, %v870
    %v872 = vrot.slane %v860, %v871
    %v873 = vadd.f32 %v865, %v872
    %v874 = vadd.f32 %v866, %v872
    %v875 = vadd.f32 %v867, %v872
    %v876 = vadd.f32 %v868, %v872
    %vm877 = vcmp.ge.f32.partialorder %v873, 0.0
    %vm878 = vcmp.ge.f32.partialorder %v874, 0.0
    %vm879 = vcmp.ge.f32.partialorder %v875, 0.0
    %vm880 = vcmp.ge.f32.partialorder %v876, 0.0
    %v881 = vmul.f32 %v873, 0.2
    %v882 = vmul.f32 %v874, 0.2
    %v883 = vmul.f32 %v875, 0.2
    %v884 = vmul.f32 %v876, 0.2
    %v885 = vsel %vm877, %v873, %v881
    %v886 = vsel %vm878, %v874, %v882
    %v887 = vsel %vm879, %v875, %v883
    %v888 = vsel %vm880, %v876, %v884
    %v889 = vpack.c.bf16 %v886, %v885
    %v890 = vpack.c.bf16 %v888, %v887
    %s891 = scalar_lea.vmem [#allocation3], 512
    %v892 = vld [vmem:[%s891] sm:$0xff]
    %v893 = vld [vmem:[%s891 + $0x8] sm:$0xff]
    %v894 = vld [vmem:[%s891 + $0x10] sm:$0xff]
    %v895 = vld [vmem:[%s891 + $0x18] sm:$0xff]
    %v896 = vld [vmem:[%s891 + $0x20] sm:$0xff]
    %v897 = vld [vmem:[%s891 + $0x28] sm:$0xff]
    %v898 = vld [vmem:[%s891 + $0x30] sm:$0xff]
    %v899 = vld [vmem:[%s891 + $0x38] sm:$0xff]
    %v900 = vld [vmem:[%s891 + $0x40] sm:$0xff]
    %v901 = vld [vmem:[%s891 + $0x48] sm:$0xff]
    %v902 = vld [vmem:[%s891 + $0x50] sm:$0xff]
    %v903 = vld [vmem:[%s891 + $0x58] sm:$0xff]
    %v904 = vld [vmem:[%s891 + $0x60] sm:$0xff]
    %v905 = vld [vmem:[%s891 + $0x68] sm:$0xff]
    %v906 = vld [vmem:[%s891 + $0x70] sm:$0xff]
    %v907 = vld [vmem:[%s891 + $0x78] sm:$0xff]
    %v908 = vld [vmem:[%s891 + $0x80] sm:$0xff]
    %v909 = vld [vmem:[%s891 + $0x88] sm:$0xff]
    %v910 = vld [vmem:[%s891 + $0x90] sm:$0xff]
    %v911 = vld [vmem:[%s891 + $0x98] sm:$0xff]
    %v912 = vld [vmem:[%s891 + $0xa0] sm:$0xff]
    %v913 = vld [vmem:[%s891 + $0xa8] sm:$0xff]
    %v914 = vld [vmem:[%s891 + $0xb0] sm:$0xff]
    %v915 = vld [vmem:[%s891 + $0xb8] sm:$0xff]
    %v916 = vld [vmem:[%s891 + $0xc0] sm:$0xff]
    %v917 = vld [vmem:[%s891 + $0xc8] sm:$0xff]
    %v918 = vld [vmem:[%s891 + $0xd0] sm:$0xff]
    %v919 = vld [vmem:[%s891 + $0xd8] sm:$0xff]
    %v920 = vld [vmem:[%s891 + $0xe0] sm:$0xff]
    %v921 = vld [vmem:[%s891 + $0xe8] sm:$0xff]
    %v922 = vld [vmem:[%s891 + $0xf0] sm:$0xff]
    %v923 = vld [vmem:[%s891 + $0xf8] sm:$0xff]
    %v956 = vunpack.c.l.b16 %v892
    %v957 = vunpack.c.h.b16 %v892
    %v958 = vunpack.c.l.b16 %v893
    %v959 = vunpack.c.h.b16 %v893
    %v960 = vunpack.c.l.b16 %v894
    %v961 = vunpack.c.h.b16 %v894
    %v962 = vunpack.c.l.b16 %v895
    %v963 = vunpack.c.h.b16 %v895
    %v964 = vunpack.c.l.b16 %v896
    %v965 = vunpack.c.h.b16 %v896
    %v966 = vunpack.c.l.b16 %v897
    %v967 = vunpack.c.h.b16 %v897
    %v968 = vunpack.c.l.b16 %v898
    %v969 = vunpack.c.h.b16 %v898
    %v970 = vunpack.c.l.b16 %v899
    %v971 = vunpack.c.h.b16 %v899
    %v972 = vunpack.c.l.b16 %v900
    %v973 = vunpack.c.h.b16 %v900
    %v974 = vunpack.c.l.b16 %v901
    %v975 = vunpack.c.h.b16 %v901
    %v976 = vunpack.c.l.b16 %v902
    %v977 = vunpack.c.h.b16 %v902
    %v978 = vunpack.c.l.b16 %v903
    %v979 = vunpack.c.h.b16 %v903
    %v980 = vunpack.c.l.b16 %v904
    %v981 = vunpack.c.h.b16 %v904
    %v982 = vunpack.c.l.b16 %v905
    %v983 = vunpack.c.h.b16 %v905
    %v984 = vunpack.c.l.b16 %v906
    %v985 = vunpack.c.h.b16 %v906
    %v986 = vunpack.c.l.b16 %v907
    %v987 = vunpack.c.h.b16 %v907
    %v988 = vunpack.c.l.b16 %v908
    %v989 = vunpack.c.h.b16 %v908
    %v990 = vunpack.c.l.b16 %v909
    %v991 = vunpack.c.h.b16 %v909
    %v992 = vunpack.c.l.b16 %v910
    %v993 = vunpack.c.h.b16 %v910
    %v994 = vunpack.c.l.b16 %v911
    %v995 = vunpack.c.h.b16 %v911
    %v996 = vunpack.c.l.b16 %v912
    %v997 = vunpack.c.h.b16 %v912
    %v998 = vunpack.c.l.b16 %v913
    %v999 = vunpack.c.h.b16 %v913
    %v1000 = vunpack.c.l.b16 %v914
    %v1001 = vunpack.c.h.b16 %v914
    %v1002 = vunpack.c.l.b16 %v915
    %v1003 = vunpack.c.h.b16 %v915
    %v1004 = vunpack.c.l.b16 %v916
    %v1005 = vunpack.c.h.b16 %v916
    %v1006 = vunpack.c.l.b16 %v917
    %v1007 = vunpack.c.h.b16 %v917
    %v1008 = vunpack.c.l.b16 %v918
    %v1009 = vunpack.c.h.b16 %v918
    %v1010 = vunpack.c.l.b16 %v919
    %v1011 = vunpack.c.h.b16 %v919
    %v1012 = vunpack.c.l.b16 %v920
    %v1013 = vunpack.c.h.b16 %v920
    %v1014 = vunpack.c.l.b16 %v921
    %v1015 = vunpack.c.h.b16 %v921
    %v1016 = vunpack.c.l.b16 %v922
    %v1017 = vunpack.c.h.b16 %v922
    %v1018 = vunpack.c.l.b16 %v923
    %v1019 = vunpack.c.h.b16 %v923
    %v1020 = vpack.c.b16 %v960, %v956
    %v1021 = vpack.c.b16 %v961, %v957
    %v1022 = vpack.c.b16 %v962, %v958
    %v1023 = vpack.c.b16 %v963, %v959
    %v1024 = vpack.c.b16 %v968, %v964
    %v1025 = vpack.c.b16 %v969, %v965
    %v1026 = vpack.c.b16 %v970, %v966
    %v1027 = vpack.c.b16 %v971, %v967
    %v1028 = vpack.c.b16 %v976, %v972
    %v1029 = vpack.c.b16 %v977, %v973
    %v1030 = vpack.c.b16 %v978, %v974
    %v1031 = vpack.c.b16 %v979, %v975
    %v1032 = vpack.c.b16 %v984, %v980
    %v1033 = vpack.c.b16 %v985, %v981
    %v1034 = vpack.c.b16 %v986, %v982
    %v1035 = vpack.c.b16 %v987, %v983
    %v1036 = vpack.c.b16 %v992, %v988
    %v1037 = vpack.c.b16 %v993, %v989
    %v1038 = vpack.c.b16 %v994, %v990
    %v1039 = vpack.c.b16 %v995, %v991
    %v1040 = vpack.c.b16 %v1000, %v996
    %v1041 = vpack.c.b16 %v1001, %v997
    %v1042 = vpack.c.b16 %v1002, %v998
    %v1043 = vpack.c.b16 %v1003, %v999
    %v1044 = vpack.c.b16 %v1008, %v1004
    %v1045 = vpack.c.b16 %v1009, %v1005
    %v1046 = vpack.c.b16 %v1010, %v1006
    %v1047 = vpack.c.b16 %v1011, %v1007
    %v1048 = vpack.c.b16 %v1016, %v1012
    %v1049 = vpack.c.b16 %v1017, %v1013
    %v1050 = vpack.c.b16 %v1018, %v1014
    %v1051 = vpack.c.b16 %v1019, %v1015
    %1084 = vmatprep.subr.bf16.mxu0 %v1021
    %1085 = vmatpush1.bf16.msra.mxu0 %v1020
    %1086 = vmatprep.subr.bf16.mxu0 %v1025
    %1087 = vmatpush1.bf16.msra.mxu0 %v1024
    %1088 = vmatprep.subr.bf16.mxu0 %v1029
    %1089 = vmatpush1.bf16.msra.mxu0 %v1028
    %1090 = vmatprep.subr.bf16.mxu0 %v1033
    %1091 = vmatpush1.bf16.msra.mxu0 %v1032
    %1092 = vmatprep.subr.bf16.mxu0 %v1037
    %1093 = vmatpush1.bf16.msra.mxu0 %v1036
    %1094 = vmatprep.subr.bf16.mxu0 %v1041
    %1095 = vmatpush1.bf16.msra.mxu0 %v1040
    %1096 = vmatprep.subr.bf16.mxu0 %v1045
    %1097 = vmatpush1.bf16.msra.mxu0 %v1044
    %1098 = vmatprep.subr.bf16.mxu0 %v1049
    %1099 = vmatpush1.bf16.msra.mxu0 %v1048
    %1100 = vmatprep.subr.bf16.mxu0 0
    %1101 = vmatpush1.bf16.msra.mxu0 0
    %1102 = vmatprep.subr.bf16.mxu0 0
    %1103 = vmatpush1.bf16.msra.mxu0 0
    %1104 = vmatprep.subr.bf16.mxu0 0
    %1105 = vmatpush1.bf16.msra.mxu0 0
    %1106 = vmatprep.subr.bf16.mxu0 0
    %1107 = vmatpush1.bf16.msra.mxu0 0
    %1108 = vmatprep.subr.bf16.mxu0 0
    %1109 = vmatpush1.bf16.msra.mxu0 0
    %1110 = vmatprep.subr.bf16.mxu0 0
    %1111 = vmatpush1.bf16.msra.mxu0 0
    %1112 = vmatprep.subr.bf16.mxu0 0
    %1113 = vmatpush1.bf16.msra.mxu0 0
    %1114 = vmatprep.subr.bf16.mxu0 0
    %1115 = vmatpush1.bf16.msra.mxu0 0
    %1116 = vmatprep.mubr.bf16.mxu0 0
    %1117 = vmatmul.mubr.bf16.gmra.mrb[0].mxu0 %v889
    %v1118 = vpop.f32.mrb[0].mxu0
    %v1119 = vadd.f32 0.0, %v1118
    %v1120 = vpop.f32.mrb[0].mxu0
    %v1121 = vadd.f32 0.0, %v1120
    %v1122 = vpop.f32.mrb[0].mxu0
    %v1123 = vadd.f32 0.0, %v1122
    %v1124 = vpop.f32.mrb[0].mxu0
    %v1125 = vadd.f32 0.0, %v1124
    %1126 = vmatprep.mubr.bf16.mxu0 0
    %1127 = vmatmul.mubr.bf16.gmra.mrb[0].mxu0 %v890
    %v1128 = vpop.f32.mrb[0].mxu0
    %v1129 = vadd.f32 0.0, %v1128
    %v1130 = vpop.f32.mrb[0].mxu0
    %v1131 = vadd.f32 0.0, %v1130
    %v1132 = vpop.f32.mrb[0].mxu0
    %v1133 = vadd.f32 0.0, %v1132
    %v1134 = vpop.f32.mrb[0].mxu0
    %v1135 = vadd.f32 0.0, %v1134
    %1136 = vdwg.mxu0
    %1137 = vmatprep.subr.bf16.mxu0 %v1023
    %1138 = vmatpush1.bf16.msra.mxu0 %v1022
    %1139 = vmatprep.subr.bf16.mxu0 %v1027
    %1140 = vmatpush1.bf16.msra.mxu0 %v1026
    %1141 = vmatprep.subr.bf16.mxu0 %v1031
    %1142 = vmatpush1.bf16.msra.mxu0 %v1030
    %1143 = vmatprep.subr.bf16.mxu0 %v1035
    %1144 = vmatpush1.bf16.msra.mxu0 %v1034
    %1145 = vmatprep.subr.bf16.mxu0 %v1039
    %1146 = vmatpush1.bf16.msra.mxu0 %v1038
    %1147 = vmatprep.subr.bf16.mxu0 %v1043
    %1148 = vmatpush1.bf16.msra.mxu0 %v1042
    %1149 = vmatprep.subr.bf16.mxu0 %v1047
    %1150 = vmatpush1.bf16.msra.mxu0 %v1046
    %1151 = vmatprep.subr.bf16.mxu0 %v1051
    %1152 = vmatpush1.bf16.msra.mxu0 %v1050
    %1153 = vmatprep.subr.bf16.mxu0 0
    %1154 = vmatpush1.bf16.msra.mxu0 0
    %1155 = vmatprep.subr.bf16.mxu0 0
    %1156 = vmatpush1.bf16.msra.mxu0 0
    %1157 = vmatprep.subr.bf16.mxu0 0
    %1158 = vmatpush1.bf16.msra.mxu0 0
    %1159 = vmatprep.subr.bf16.mxu0 0
    %1160 = vmatpush1.bf16.msra.mxu0 0
    %1161 = vmatprep.subr.bf16.mxu0 0
    %1162 = vmatpush1.bf16.msra.mxu0 0
    %1163 = vmatprep.subr.bf16.mxu0 0
    %1164 = vmatpush1.bf16.msra.mxu0 0
    %1165 = vmatprep.subr.bf16.mxu0 0
    %1166 = vmatpush1.bf16.msra.mxu0 0
    %1167 = vmatprep.subr.bf16.mxu0 0
    %1168 = vmatpush1.bf16.msra.mxu0 0
    %1169 = vmatprep.mubr.bf16.mxu0 0
    %1170 = vmatmul.mubr.bf16.gmra.mrb[0].mxu0 %v889
    %v1171 = vpop.f32.mrb[0].mxu0
    %v1172 = vadd.f32 0.0, %v1171
    %v1173 = vpop.f32.mrb[0].mxu0
    %v1174 = vadd.f32 0.0, %v1173
    %v1175 = vpop.f32.mrb[0].mxu0
    %v1176 = vadd.f32 0.0, %v1175
    %v1177 = vpop.f32.mrb[0].mxu0
    %v1178 = vadd.f32 0.0, %v1177
    %1179 = vmatprep.mubr.bf16.mxu0 0
    %1180 = vmatmul.mubr.bf16.gmra.mrb[0].mxu0 %v890
    %v1181 = vpop.f32.mrb[0].mxu0
    %v1182 = vadd.f32 0.0, %v1181
    %v1183 = vpop.f32.mrb[0].mxu0
    %v1184 = vadd.f32 0.0, %v1183
    %v1185 = vpop.f32.mrb[0].mxu0
    %v1186 = vadd.f32 0.0, %v1185
    %v1187 = vpop.f32.mrb[0].mxu0
    %v1188 = vadd.f32 0.0, %v1187
    %1189 = vdwg.mxu0
    %v1190 = vpack.c.bf16 %v1123, %v1119
    %v1191 = vpack.c.bf16 %v1133, %v1129
    %1192 = vst [vmem:[#allocation2] sm:$0xff] %v1190
    %1193 = vst [vmem:[#allocation2 + $0x8] sm:$0xff] %v1191
    %v1194 = vpack.c.bf16 %v1125, %v1121
    %v1195 = vpack.c.bf16 %v1135, %v1131
    %1196 = vst [vmem:[#allocation2 + $0x10] sm:$0xff] %v1194
    %1197 = vst [vmem:[#allocation2 + $0x18] sm:$0xff] %v1195
    %v1198 = vpack.c.bf16 %v1176, %v1172
    %v1199 = vpack.c.bf16 %v1186, %v1182
    %1200 = vst [vmem:[#allocation2 + $0x20] sm:$0xff] %v1198
    %1201 = vst [vmem:[#allocation2 + $0x28] sm:$0xff] %v1199
    %v1202 = vpack.c.bf16 %v1178, %v1174
    %v1203 = vpack.c.bf16 %v1188, %v1184
    %1204 = vst [vmem:[#allocation2 + $0x30] sm:$0xff] %v1202
    %1205 = vst [vmem:[#allocation2 + $0x38] sm:$0xff] %v1203
    %s1206 = scalar_lea.vmem %s1, 32
    %v1207 = vld [vmem:[%s1206] sm:$0xf]
    %v1208 = vld [vmem:[%s1206 + $0x4] sm:$0xf]
    %v1209 = vld [vmem:[%s1206 + $0x8] sm:$0xf]
    %v1210 = vld [vmem:[%s1206 + $0xc] sm:$0xf]
    %v1211 = vld [vmem:[#allocation2] sm:$0xff]
    %v1212 = vld [vmem:[#allocation2 + $0x8] sm:$0xff]
    %v1213 = vld [vmem:[#allocation2 + $0x10] sm:$0xff]
    %v1214 = vld [vmem:[#allocation2 + $0x18] sm:$0xff]
    %v1215 = vld [vmem:[#allocation2 + $0x20] sm:$0xff]
    %v1216 = vld [vmem:[#allocation2 + $0x28] sm:$0xff]
    %v1217 = vld [vmem:[#allocation2 + $0x30] sm:$0xff]
    %v1218 = vld [vmem:[#allocation2 + $0x38] sm:$0xff]
    %v1223 = vunpack.c.l.b16 %v1207
    %v1224 = vunpack.c.l.b16 %v1208
    %v1225 = vunpack.c.l.b16 %v1209
    %v1226 = vunpack.c.l.b16 %v1210
    %v1227 = vpack.c.b16 %v1224, %v1223
    %v1228 = vpack.c.b16 %v1226, %v1225
    %1231 = vmatprep.subr.bf16.mxu0 0
    %1232 = vmatpush1.bf16.msra.mxu0 %v1211
    %1233 = vmatprep.subr.bf16.mxu0 0
    %1234 = vmatpush1.bf16.msra.mxu0 %v1212
    %1235 = vmatprep.subr.bf16.mxu0 0
    %1236 = vmatpush1.bf16.msra.mxu0 %v1213
    %1237 = vmatprep.subr.bf16.mxu0 0
    %1238 = vmatpush1.bf16.msra.mxu0 %v1214
    %1239 = vmatprep.subr.bf16.mxu0 0
    %1240 = vmatpush1.bf16.msra.mxu0 %v1215
    %1241 = vmatprep.subr.bf16.mxu0 0
    %1242 = vmatpush1.bf16.msra.mxu0 %v1216
    %1243 = vmatprep.subr.bf16.mxu0 0
    %1244 = vmatpush1.bf16.msra.mxu0 %v1217
    %1245 = vmatprep.subr.bf16.mxu0 0
    %1246 = vmatpush1.bf16.msra.mxu0 %v1218
    %1247 = vmatprep.subr.bf16.mxu0 0
    %1248 = vmatpush1.bf16.msra.mxu0 0
    %1249 = vmatprep.subr.bf16.mxu0 0
    %1250 = vmatpush1.bf16.msra.mxu0 0
    %1251 = vmatprep.subr.bf16.mxu0 0
    %1252 = vmatpush1.bf16.msra.mxu0 0
    %1253 = vmatprep.subr.bf16.mxu0 0
    %1254 = vmatpush1.bf16.msra.mxu0 0
    %1255 = vmatprep.subr.bf16.mxu0 0
    %1256 = vmatpush1.bf16.msra.mxu0 0
    %1257 = vmatprep.subr.bf16.mxu0 0
    %1258 = vmatpush1.bf16.msra.mxu0 0
    %1259 = vmatprep.subr.bf16.mxu0 0
    %1260 = vmatpush1.bf16.msra.mxu0 0
    %1261 = vmatprep.subr.bf16.mxu0 0
    %1262 = vmatpush1.bf16.msra.mxu0 0
    %1263 = vmatprep.mubr.bf16.mxu0 0
    %1264 = vmatmul.mubr.bf16.gmra.mrb[0].mxu0 %v1227
    %v1265 = vpop.f32.mrb[0].mxu0
    %v1266 = vadd.f32 0.0, %v1265
    %v1267 = vpop.f32.mrb[0].mxu0
    %v1268 = vpop.f32.mrb[0].mxu0
    %v1269 = vadd.f32 0.0, %v1268
    %v1270 = vpop.f32.mrb[0].mxu0
    %1271 = vmatprep.mubr.bf16.mxu0 0
    %1272 = vmatmul.mubr.bf16.gmra.mrb[0].mxu0 %v1228
    %v1273 = vpop.f32.mrb[0].mxu0
    %v1274 = vadd.f32 0.0, %v1273
    %v1275 = vpop.f32.mrb[0].mxu0
    %v1276 = vpop.f32.mrb[0].mxu0
    %v1277 = vadd.f32 0.0, %v1276
    %v1278 = vpop.f32.mrb[0].mxu0
    %1279 = vdwg.mxu0
    %v1280 = vadd.f32 %v1266, %v1269
    %v1281 = vadd.f32 %v1280, %v1274
    %v1282 = vadd.f32 %v1281, %v1277
    %v1283 = vrot.slane %v1282, 4
    %v1284 = vadd.f32 %v1282, %v1283
    %v1285 = vrot.slane %v1284, 2
    %v1286 = vadd.f32 %v1284, %v1285
    %v1287 = vrot.slane %v1286, 1
    %v1288 = vadd.f32 %v1286, %v1287
    %v1289 = vmul.f32 %v1288, 0.16666667
    %v1290 = vmul.f32 %v1266, %v1266
    %v1291 = vmul.f32 %v1269, %v1269
    %v1292 = vmul.f32 %v1274, %v1274
    %v1293 = vmul.f32 %v1277, %v1277
    %v1294 = vadd.f32 %v1290, %v1291
    %v1295 = vadd.f32 %v1294, %v1292
    %v1296 = vadd.f32 %v1295, %v1293
    %v1297 = vrot.slane %v1296, 4
    %v1298 = vadd.f32 %v1296, %v1297
    %v1299 = vrot.slane %v1298, 2
    %v1300 = vadd.f32 %v1298, %v1299
    %v1301 = vrot.slane %v1300, 1
    %v1302 = vadd.f32 %v1300, %v1301
    %v1303 = vmul.f32 %v1302, 0.16666667
    %v1304 = vmul.f32 %v1289, %v1289
    %v1305 = vsub.f32 %v1303, %v1304
    %v1306 = vld [vmem:[%s3 + $0x1] sm:$0x1]
    %v1307 = vld [vmem:[%s3 + $0x5] sm:$0x1]
    %v1308 = vadd.f32 %v1305, 1e-05
    %v1309 = vrsqrt.pop %v1308
    %v1310 = vmul.f32 %v1306, %v1309
    %v1311 = vmul.f32 %v1289, %v1310
    %v1312 = vsub.f32 %v1307, %v1311
    %v1313 = vlaneseq
    %v1314 = vshrl.u32 %v1313, 7
    %v1315 = vsub.s32 0, %v1314
    %v1316 = vrot.slane %v1310, %v1315
    %v1317 = vmul.f32 %v1266, %v1316
    %v1318 = vmul.f32 %v1269, %v1316
    %v1319 = vmul.f32 %v1274, %v1316
    %v1320 = vmul.f32 %v1277, %v1316
    %v1321 = vlaneseq
    %v1322 = vshrl.u32 %v1321, 7
    %v1323 = vsub.s32 0, %v1322
    %v1324 = vrot.slane %v1312, %v1323
    %v1325 = vadd.f32 %v1317, %v1324
    %v1326 = vadd.f32 %v1318, %v1324
    %v1327 = vadd.f32 %v1319, %v1324
    %v1328 = vadd.f32 %v1320, %v1324
    %vm1329 = vcmp.ge.f32.partialorder %v1325, 0.0
    %vm1330 = vcmp.ge.f32.partialorder %v1326, 0.0
    %vm1331 = vcmp.ge.f32.partialorder %v1327, 0.0
    %vm1332 = vcmp.ge.f32.partialorder %v1328, 0.0
    %v1333 = vmul.f32 %v1325, 0.2
    %v1334 = vmul.f32 %v1326, 0.2
    %v1335 = vmul.f32 %v1327, 0.2
    %v1336 = vmul.f32 %v1328, 0.2
    %v1337 = vsel %vm1329, %v1325, %v1333
    %v1338 = vsel %vm1330, %v1326, %v1334
    %v1339 = vsel %vm1331, %v1327, %v1335
    %v1340 = vsel %vm1332, %v1328, %v1336
    %v1341 = vpack.c.bf16 %v1338, %v1337
    %v1342 = vpack.c.bf16 %v1340, %v1339
    %s1343 = scalar_lea.vmem [#allocation3], 768
    %v1344 = vld [vmem:[%s1343] sm:$0xff]
    %v1345 = vld [vmem:[%s1343 + $0x8] sm:$0xff]
    %v1346 = vld [vmem:[%s1343 + $0x10] sm:$0xff]
    %v1347 = vld [vmem:[%s1343 + $0x18] sm:$0xff]
    %v1348 = vld [vmem:[%s1343 + $0x20] sm:$0xff]
    %v1349 = vld [vmem:[%s1343 + $0x28] sm:$0xff]
    %v1350 = vld [vmem:[%s1343 + $0x30] sm:$0xff]
    %v1351 = vld [vmem:[%s1343 + $0x38] sm:$0xff]
    %v1352 = vld [vmem:[%s1343 + $0x40] sm:$0xff]
    %v1353 = vld [vmem:[%s1343 + $0x48] sm:$0xff]
    %v1354 = vld [vmem:[%s1343 + $0x50] sm:$0xff]
    %v1355 = vld [vmem:[%s1343 + $0x58] sm:$0xff]
    %v1356 = vld [vmem:[%s1343 + $0x60] sm:$0xff]
    %v1357 = vld [vmem:[%s1343 + $0x68] sm:$0xff]
    %v1358 = vld [vmem:[%s1343 + $0x70] sm:$0xff]
    %v1359 = vld [vmem:[%s1343 + $0x78] sm:$0xff]
    %v1360 = vld [vmem:[%s1343 + $0x80] sm:$0xff]
    %v1361 = vld [vmem:[%s1343 + $0x88] sm:$0xff]
    %v1362 = vld [vmem:[%s1343 + $0x90] sm:$0xff]
    %v1363 = vld [vmem:[%s1343 + $0x98] sm:$0xff]
    %v1364 = vld [vmem:[%s1343 + $0xa0] sm:$0xff]
    %v1365 = vld [vmem:[%s1343 + $0xa8] sm:$0xff]
    %v1366 = vld [vmem:[%s1343 + $0xb0] sm:$0xff]
    %v1367 = vld [vmem:[%s1343 + $0xb8] sm:$0xff]
    %v1368 = vld [vmem:[%s1343 + $0xc0] sm:$0xff]
    %v1369 = vld [vmem:[%s1343 + $0xc8] sm:$0xff]
    %v1370 = vld [vmem:[%s1343 + $0xd0] sm:$0xff]
    %v1371 = vld [vmem:[%s1343 + $0xd8] sm:$0xff]
    %v1372 = vld [vmem:[%s1343 + $0xe0] sm:$0xff]
    %v1373 = vld [vmem:[%s1343 + $0xe8] sm:$0xff]
    %v1374 = vld [vmem:[%s1343 + $0xf0] sm:$0xff]
    %v1375 = vld [vmem:[%s1343 + $0xf8] sm:$0xff]
    %v1408 = vunpack.c.l.b16 %v1344
    %v1409 = vunpack.c.h.b16 %v1344
    %v1410 = vunpack.c.l.b16 %v1345
    %v1411 = vunpack.c.h.b16 %v1345
    %v1412 = vunpack.c.l.b16 %v1346
    %v1413 = vunpack.c.h.b16 %v1346
    %v1414 = vunpack.c.l.b16 %v1347
    %v1415 = vunpack.c.h.b16 %v1347
    %v1416 = vunpack.c.l.b16 %v1348
    %v1417 = vunpack.c.h.b16 %v1348
    %v1418 = vunpack.c.l.b16 %v1349
    %v1419 = vunpack.c.h.b16 %v1349
    %v1420 = vunpack.c.l.b16 %v1350
    %v1421 = vunpack.c.h.b16 %v1350
    %v1422 = vunpack.c.l.b16 %v1351
    %v1423 = vunpack.c.h.b16 %v1351
    %v1424 = vunpack.c.l.b16 %v1352
    %v1425 = vunpack.c.h.b16 %v1352
    %v1426 = vunpack.c.l.b16 %v1353
    %v1427 = vunpack.c.h.b16 %v1353
    %v1428 = vunpack.c.l.b16 %v1354
    %v1429 = vunpack.c.h.b16 %v1354
    %v1430 = vunpack.c.l.b16 %v1355
    %v1431 = vunpack.c.h.b16 %v1355
    %v1432 = vunpack.c.l.b16 %v1356
    %v1433 = vunpack.c.h.b16 %v1356
    %v1434 = vunpack.c.l.b16 %v1357
    %v1435 = vunpack.c.h.b16 %v1357
    %v1436 = vunpack.c.l.b16 %v1358
    %v1437 = vunpack.c.h.b16 %v1358
    %v1438 = vunpack.c.l.b16 %v1359
    %v1439 = vunpack.c.h.b16 %v1359
    %v1440 = vunpack.c.l.b16 %v1360
    %v1441 = vunpack.c.h.b16 %v1360
    %v1442 = vunpack.c.l.b16 %v1361
    %v1443 = vunpack.c.h.b16 %v1361
    %v1444 = vunpack.c.l.b16 %v1362
    %v1445 = vunpack.c.h.b16 %v1362
    %v1446 = vunpack.c.l.b16 %v1363
    %v1447 = vunpack.c.h.b16 %v1363
    %v1448 = vunpack.c.l.b16 %v1364
    %v1449 = vunpack.c.h.b16 %v1364
    %v1450 = vunpack.c.l.b16 %v1365
    %v1451 = vunpack.c.h.b16 %v1365
    %v1452 = vunpack.c.l.b16 %v1366
    %v1453 = vunpack.c.h.b16 %v1366
    %v1454 = vunpack.c.l.b16 %v1367
    %v1455 = vunpack.c.h.b16 %v1367
    %v1456 = vunpack.c.l.b16 %v1368
    %v1457 = vunpack.c.h.b16 %v1368
    %v1458 = vunpack.c.l.b16 %v1369
    %v1459 = vunpack.c.h.b16 %v1369
    %v1460 = vunpack.c.l.b16 %v1370
    %v1461 = vunpack.c.h.b16 %v1370
    %v1462 = vunpack.c.l.b16 %v1371
    %v1463 = vunpack.c.h.b16 %v1371
    %v1464 = vunpack.c.l.b16 %v1372
    %v1465 = vunpack.c.h.b16 %v1372
    %v1466 = vunpack.c.l.b16 %v1373
    %v1467 = vunpack.c.h.b16 %v1373
    %v1468 = vunpack.c.l.b16 %v1374
    %v1469 = vunpack.c.h.b16 %v1374
    %v1470 = vunpack.c.l.b16 %v1375
    %v1471 = vunpack.c.h.b16 %v1375
    %v1472 = vpack.c.b16 %v1412, %v1408
    %v1473 = vpack.c.b16 %v1413, %v1409
    %v1474 = vpack.c.b16 %v1414, %v1410
    %v1475 = vpack.c.b16 %v1415, %v1411
    %v1476 = vpack.c.b16 %v1420, %v1416
    %v1477 = vpack.c.b16 %v1421, %v1417
    %v1478 = vpack.c.b16 %v1422, %v1418
    %v1479 = vpack.c.b16 %v1423, %v1419
    %v1480 = vpack.c.b16 %v1428, %v1424
    %v1481 = vpack.c.b16 %v1429, %v1425
    %v1482 = vpack.c.b16 %v1430, %v1426
    %v1483 = vpack.c.b16 %v1431, %v1427
    %v1484 = vpack.c.b16 %v1436, %v1432
    %v1485 = vpack.c.b16 %v1437, %v1433
    %v1486 = vpack.c.b16 %v1438, %v1434
    %v1487 = vpack.c.b16 %v1439, %v1435
    %v1488 = vpack.c.b16 %v1444, %v1440
    %v1489 = vpack.c.b16 %v1445, %v1441
    %v1490 = vpack.c.b16 %v1446, %v1442
    %v1491 = vpack.c.b16 %v1447, %v1443
    %v1492 = vpack.c.b16 %v1452, %v1448
    %v1493 = vpack.c.b16 %v1453, %v1449
    %v1494 = vpack.c.b16 %v1454, %v1450
    %v1495 = vpack.c.b16 %v1455, %v1451
    %v1496 = vpack.c.b16 %v1460, %v1456
    %v1497 = vpack.c.b16 %v1461, %v1457
    %v1498 = vpack.c.b16 %v1462, %v1458
    %v1499 = vpack.c.b16 %v1463, %v1459
    %v1500 = vpack.c.b16 %v1468, %v1464
    %v1501 = vpack.c.b16 %v1469, %v1465
    %v1502 = vpack.c.b16 %v1470, %v1466
    %v1503 = vpack.c.b16 %v1471, %v1467
    %1536 = vmatprep.subr.bf16.mxu0 %v1473
    %1537 = vmatpush1.bf16.msra.mxu0 %v1472
    %1538 = vmatprep.subr.bf16.mxu0 %v1477
    %1539 = vmatpush1.bf16.msra.mxu0 %v1476
    %1540 = vmatprep.subr.bf16.mxu0 %v1481
    %1541 = vmatpush1.bf16.msra.mxu0 %v1480
    %1542 = vmatprep.subr.bf16.mxu0 %v1485
    %1543 = vmatpush1.bf16.msra.mxu0 %v1484
    %1544 = vmatprep.subr.bf16.mxu0 %v1489
    %1545 = vmatpush1.bf16.msra.mxu0 %v1488
    %1546 = vmatprep.subr.bf16.mxu0 %v1493
    %1547 = vmatpush1.bf16.msra.mxu0 %v1492
    %1548 = vmatprep.subr.bf16.mxu0 %v1497
    %1549 = vmatpush1.bf16.msra.mxu0 %v1496
    %1550 = vmatprep.subr.bf16.mxu0 %v1501
    %1551 = vmatpush1.bf16.msra.mxu0 %v1500
    %1552 = vmatprep.subr.bf16.mxu0 0
    %1553 = vmatpush1.bf16.msra.mxu0 0
    %1554 = vmatprep.subr.bf16.mxu0 0
    %1555 = vmatpush1.bf16.msra.mxu0 0
    %1556 = vmatprep.subr.bf16.mxu0 0
    %1557 = vmatpush1.bf16.msra.mxu0 0
    %1558 = vmatprep.subr.bf16.mxu0 0
    %1559 = vmatpush1.bf16.msra.mxu0 0
    %1560 = vmatprep.subr.bf16.mxu0 0
    %1561 = vmatpush1.bf16.msra.mxu0 0
    %1562 = vmatprep.subr.bf16.mxu0 0
    %1563 = vmatpush1.bf16.msra.mxu0 0
    %1564 = vmatprep.subr.bf16.mxu0 0
    %1565 = vmatpush1.bf16.msra.mxu0 0
    %1566 = vmatprep.subr.bf16.mxu0 0
    %1567 = vmatpush1.bf16.msra.mxu0 0
    %1568 = vmatprep.mubr.bf16.mxu0 0
    %1569 = vmatmul.mubr.bf16.gmra.mrb[0].mxu0 %v1341
    %v1570 = vpop.f32.mrb[0].mxu0
    %v1571 = vadd.f32 0.0, %v1570
    %v1572 = vpop.f32.mrb[0].mxu0
    %v1573 = vadd.f32 0.0, %v1572
    %v1574 = vpop.f32.mrb[0].mxu0
    %v1575 = vadd.f32 0.0, %v1574
    %v1576 = vpop.f32.mrb[0].mxu0
    %v1577 = vadd.f32 0.0, %v1576
    %1578 = vmatprep.mubr.bf16.mxu0 0
    %1579 = vmatmul.mubr.bf16.gmra.mrb[0].mxu0 %v1342
    %v1580 = vpop.f32.mrb[0].mxu0
    %v1581 = vadd.f32 0.0, %v1580
    %v1582 = vpop.f32.mrb[0].mxu0
    %v1583 = vadd.f32 0.0, %v1582
    %v1584 = vpop.f32.mrb[0].mxu0
    %v1585 = vadd.f32 0.0, %v1584
    %v1586 = vpop.f32.mrb[0].mxu0
    %v1587 = vadd.f32 0.0, %v1586
    %1588 = vdwg.mxu0
    %1589 = vmatprep.subr.bf16.mxu0 %v1475
    %1590 = vmatpush1.bf16.msra.mxu0 %v1474
    %1591 = vmatprep.subr.bf16.mxu0 %v1479
    %1592 = vmatpush1.bf16.msra.mxu0 %v1478
    %1593 = vmatprep.subr.bf16.mxu0 %v1483
    %1594 = vmatpush1.bf16.msra.mxu0 %v1482
    %1595 = vmatprep.subr.bf16.mxu0 %v1487
    %1596 = vmatpush1.bf16.msra.mxu0 %v1486
    %1597 = vmatprep.subr.bf16.mxu0 %v1491
    %1598 = vmatpush1.bf16.msra.mxu0 %v1490
    %1599 = vmatprep.subr.bf16.mxu0 %v1495
    %1600 = vmatpush1.bf16.msra.mxu0 %v1494
    %1601 = vmatprep.subr.bf16.mxu0 %v1499
    %1602 = vmatpush1.bf16.msra.mxu0 %v1498
    %1603 = vmatprep.subr.bf16.mxu0 %v1503
    %1604 = vmatpush1.bf16.msra.mxu0 %v1502
    %1605 = vmatprep.subr.bf16.mxu0 0
    %1606 = vmatpush1.bf16.msra.mxu0 0
    %1607 = vmatprep.subr.bf16.mxu0 0
    %1608 = vmatpush1.bf16.msra.mxu0 0
    %1609 = vmatprep.subr.bf16.mxu0 0
    %1610 = vmatpush1.bf16.msra.mxu0 0
    %1611 = vmatprep.subr.bf16.mxu0 0
    %1612 = vmatpush1.bf16.msra.mxu0 0
    %1613 = vmatprep.subr.bf16.mxu0 0
    %1614 = vmatpush1.bf16.msra.mxu0 0
    %1615 = vmatprep.subr.bf16.mxu0 0
    %1616 = vmatpush1.bf16.msra.mxu0 0
    %1617 = vmatprep.subr.bf16.mxu0 0
    %1618 = vmatpush1.bf16.msra.mxu0 0
    %1619 = vmatprep.subr.bf16.mxu0 0
    %1620 = vmatpush1.bf16.msra.mxu0 0
    %1621 = vmatprep.mubr.bf16.mxu0 0
    %1622 = vmatmul.mubr.bf16.gmra.mrb[0].mxu0 %v1341
    %v1623 = vpop.f32.mrb[0].mxu0
    %v1624 = vadd.f32 0.0, %v1623
    %v1625 = vpop.f32.mrb[0].mxu0
    %v1626 = vadd.f32 0.0, %v1625
    %v1627 = vpop.f32.mrb[0].mxu0
    %v1628 = vadd.f32 0.0, %v1627
    %v1629 = vpop.f32.mrb[0].mxu0
    %v1630 = vadd.f32 0.0, %v1629
    %1631 = vmatprep.mubr.bf16.mxu0 0
    %1632 = vmatmul.mubr.bf16.gmra.mrb[0].mxu0 %v1342
    %v1633 = vpop.f32.mrb[0].mxu0
    %v1634 = vadd.f32 0.0, %v1633
    %v1635 = vpop.f32.mrb[0].mxu0
    %v1636 = vadd.f32 0.0, %v1635
    %v1637 = vpop.f32.mrb[0].mxu0
    %v1638 = vadd.f32 0.0, %v1637
    %v1639 = vpop.f32.mrb[0].mxu0
    %v1640 = vadd.f32 0.0, %v1639
    %1641 = vdwg.mxu0
    %v1642 = vpack.c.bf16 %v1575, %v1571
    %v1643 = vpack.c.bf16 %v1585, %v1581
    %1644 = vst [vmem:[#allocation2] sm:$0xff] %v1642
    %1645 = vst [vmem:[#allocation2 + $0x8] sm:$0xff] %v1643
    %v1646 = vpack.c.bf16 %v1577, %v1573
    %v1647 = vpack.c.bf16 %v1587, %v1583
    %1648 = vst [vmem:[#allocation2 + $0x10] sm:$0xff] %v1646
    %1649 = vst [vmem:[#allocation2 + $0x18] sm:$0xff] %v1647
    %v1650 = vpack.c.bf16 %v1628, %v1624
    %v1651 = vpack.c.bf16 %v1638, %v1634
    %1652 = vst [vmem:[#allocation2 + $0x20] sm:$0xff] %v1650
    %1653 = vst [vmem:[#allocation2 + $0x28] sm:$0xff] %v1651
    %v1654 = vpack.c.bf16 %v1630, %v1626
    %v1655 = vpack.c.bf16 %v1640, %v1636
    %1656 = vst [vmem:[#allocation2 + $0x30] sm:$0xff] %v1654
    %1657 = vst [vmem:[#allocation2 + $0x38] sm:$0xff] %v1655
    %s1658 = scalar_lea.vmem %s1, 48
    %v1659 = vld [vmem:[%s1658] sm:$0xf]
    %v1660 = vld [vmem:[%s1658 + $0x4] sm:$0xf]
    %v1661 = vld [vmem:[%s1658 + $0x8] sm:$0xf]
    %v1662 = vld [vmem:[%s1658 + $0xc] sm:$0xf]
    %v1663 = vld [vmem:[#allocation2] sm:$0xff]
    %v1664 = vld [vmem:[#allocation2 + $0x8] sm:$0xff]
    %v1665 = vld [vmem:[#allocation2 + $0x10] sm:$0xff]
    %v1666 = vld [vmem:[#allocation2 + $0x18] sm:$0xff]
    %v1667 = vld [vmem:[#allocation2 + $0x20] sm:$0xff]
    %v1668 = vld [vmem:[#allocation2 + $0x28] sm:$0xff]
    %v1669 = vld [vmem:[#allocation2 + $0x30] sm:$0xff]
    %v1670 = vld [vmem:[#allocation2 + $0x38] sm:$0xff]
    %v1675 = vunpack.c.l.b16 %v1659
    %v1676 = vunpack.c.l.b16 %v1660
    %v1677 = vunpack.c.l.b16 %v1661
    %v1678 = vunpack.c.l.b16 %v1662
    %v1679 = vpack.c.b16 %v1676, %v1675
    %v1680 = vpack.c.b16 %v1678, %v1677
    %1683 = vmatprep.subr.bf16.mxu0 0
    %1684 = vmatpush1.bf16.msra.mxu0 %v1663
    %1685 = vmatprep.subr.bf16.mxu0 0
    %1686 = vmatpush1.bf16.msra.mxu0 %v1664
    %1687 = vmatprep.subr.bf16.mxu0 0
    %1688 = vmatpush1.bf16.msra.mxu0 %v1665
    %1689 = vmatprep.subr.bf16.mxu0 0
    %1690 = vmatpush1.bf16.msra.mxu0 %v1666
    %1691 = vmatprep.subr.bf16.mxu0 0
    %1692 = vmatpush1.bf16.msra.mxu0 %v1667
    %1693 = vmatprep.subr.bf16.mxu0 0
    %1694 = vmatpush1.bf16.msra.mxu0 %v1668
    %1695 = vmatprep.subr.bf16.mxu0 0
    %1696 = vmatpush1.bf16.msra.mxu0 %v1669
    %1697 = vmatprep.subr.bf16.mxu0 0
    %1698 = vmatpush1.bf16.msra.mxu0 %v1670
    %1699 = vmatprep.subr.bf16.mxu0 0
    %1700 = vmatpush1.bf16.msra.mxu0 0
    %1701 = vmatprep.subr.bf16.mxu0 0
    %1702 = vmatpush1.bf16.msra.mxu0 0
    %1703 = vmatprep.subr.bf16.mxu0 0
    %1704 = vmatpush1.bf16.msra.mxu0 0
    %1705 = vmatprep.subr.bf16.mxu0 0
    %1706 = vmatpush1.bf16.msra.mxu0 0
    %1707 = vmatprep.subr.bf16.mxu0 0
    %1708 = vmatpush1.bf16.msra.mxu0 0
    %1709 = vmatprep.subr.bf16.mxu0 0
    %1710 = vmatpush1.bf16.msra.mxu0 0
    %1711 = vmatprep.subr.bf16.mxu0 0
    %1712 = vmatpush1.bf16.msra.mxu0 0
    %1713 = vmatprep.subr.bf16.mxu0 0
    %1714 = vmatpush1.bf16.msra.mxu0 0
    %1715 = vmatprep.mubr.bf16.mxu0 0
    %1716 = vmatmul.mubr.bf16.gmra.mrb[0].mxu0 %v1679
    %v1717 = vpop.f32.mrb[0].mxu0
    %v1718 = vadd.f32 0.0, %v1717
    %v1719 = vpop.f32.mrb[0].mxu0
    %v1720 = vpop.f32.mrb[0].mxu0
    %v1721 = vadd.f32 0.0, %v1720
    %v1722 = vpop.f32.mrb[0].mxu0
    %1723 = vmatprep.mubr.bf16.mxu0 0
    %1724 = vmatmul.mubr.bf16.gmra.mrb[0].mxu0 %v1680
    %v1725 = vpop.f32.mrb[0].mxu0
    %v1726 = vadd.f32 0.0, %v1725
    %v1727 = vpop.f32.mrb[0].mxu0
    %v1728 = vpop.f32.mrb[0].mxu0
    %v1729 = vadd.f32 0.0, %v1728
    %v1730 = vpop.f32.mrb[0].mxu0
    %1731 = vdwg.mxu0
    %v1732 = vadd.f32 %v1718, %v1721
    %v1733 = vadd.f32 %v1732, %v1726
    %v1734 = vadd.f32 %v1733, %v1729
    %v1735 = vrot.slane %v1734, 4
    %v1736 = vadd.f32 %v1734, %v1735
    %v1737 = vrot.slane %v1736, 2
    %v1738 = vadd.f32 %v1736, %v1737
    %v1739 = vrot.slane %v1738, 1
    %v1740 = vadd.f32 %v1738, %v1739
    %v1741 = vmul.f32 %v1740, 0.125
    %v1742 = vmul.f32 %v1718, %v1718
    %v1743 = vmul.f32 %v1721, %v1721
    %v1744 = vmul.f32 %v1726, %v1726
    %v1745 = vmul.f32 %v1729, %v1729
    %v1746 = vadd.f32 %v1742, %v1743
    %v1747 = vadd.f32 %v1746, %v1744
    %v1748 = vadd.f32 %v1747, %v1745
    %v1749 = vrot.slane %v1748, 4
    %v1750 = vadd.f32 %v1748, %v1749
    %v1751 = vrot.slane %v1750, 2
    %v1752 = vadd.f32 %v1750, %v1751
    %v1753 = vrot.slane %v1752, 1
    %v1754 = vadd.f32 %v1752, %v1753
    %v1755 = vmul.f32 %v1754, 0.125
    %v1756 = vmul.f32 %v1741, %v1741
    %v1757 = vsub.f32 %v1755, %v1756
    %v1758 = vld [vmem:[%s3 + $0x2] sm:$0x1]
    %v1759 = vld [vmem:[%s3 + $0x6] sm:$0x1]
    %v1760 = vadd.f32 %v1757, 1e-05
    %v1761 = vrsqrt.pop %v1760
    %v1762 = vmul.f32 %v1758, %v1761
    %v1763 = vmul.f32 %v1741, %v1762
    %v1764 = vsub.f32 %v1759, %v1763
    %v1765 = vlaneseq
    %v1766 = vshrl.u32 %v1765, 7
    %v1767 = vsub.s32 0, %v1766
    %v1768 = vrot.slane %v1762, %v1767
    %v1769 = vmul.f32 %v1718, %v1768
    %v1770 = vmul.f32 %v1721, %v1768
    %v1771 = vmul.f32 %v1726, %v1768
    %v1772 = vmul.f32 %v1729, %v1768
    %v1773 = vlaneseq
    %v1774 = vshrl.u32 %v1773, 7
    %v1775 = vsub.s32 0, %v1774
    %v1776 = vrot.slane %v1764, %v1775
    %v1777 = vadd.f32 %v1769, %v1776
    %v1778 = vadd.f32 %v1770, %v1776
    %v1779 = vadd.f32 %v1771, %v1776
    %v1780 = vadd.f32 %v1772, %v1776
    %vm1781 = vcmp.ge.f32.partialorder %v1777, 0.0
    %vm1782 = vcmp.ge.f32.partialorder %v1778, 0.0
    %vm1783 = vcmp.ge.f32.partialorder %v1779, 0.0
    %vm1784 = vcmp.ge.f32.partialorder %v1780, 0.0
    %v1785 = vmul.f32 %v1777, 0.2
    %v1786 = vmul.f32 %v1778, 0.2
    %v1787 = vmul.f32 %v1779, 0.2
    %v1788 = vmul.f32 %v1780, 0.2
    %v1789 = vsel %vm1781, %v1777, %v1785
    %v1790 = vsel %vm1782, %v1778, %v1786
    %v1791 = vsel %vm1783, %v1779, %v1787
    %v1792 = vsel %vm1784, %v1780, %v1788
    %v1793 = vpack.c.bf16 %v1790, %v1789
    %v1794 = vpack.c.bf16 %v1792, %v1791
    %s1795 = scalar_lea.vmem [#allocation3], 1024
    %v1796 = vld [vmem:[%s1795] sm:$0xff]
    %v1797 = vld [vmem:[%s1795 + $0x8] sm:$0xff]
    %v1798 = vld [vmem:[%s1795 + $0x10] sm:$0xff]
    %v1799 = vld [vmem:[%s1795 + $0x18] sm:$0xff]
    %v1800 = vld [vmem:[%s1795 + $0x20] sm:$0xff]
    %v1801 = vld [vmem:[%s1795 + $0x28] sm:$0xff]
    %v1802 = vld [vmem:[%s1795 + $0x30] sm:$0xff]
    %v1803 = vld [vmem:[%s1795 + $0x38] sm:$0xff]
    %v1804 = vld [vmem:[%s1795 + $0x40] sm:$0xff]
    %v1805 = vld [vmem:[%s1795 + $0x48] sm:$0xff]
    %v1806 = vld [vmem:[%s1795 + $0x50] sm:$0xff]
    %v1807 = vld [vmem:[%s1795 + $0x58] sm:$0xff]
    %v1808 = vld [vmem:[%s1795 + $0x60] sm:$0xff]
    %v1809 = vld [vmem:[%s1795 + $0x68] sm:$0xff]
    %v1810 = vld [vmem:[%s1795 + $0x70] sm:$0xff]
    %v1811 = vld [vmem:[%s1795 + $0x78] sm:$0xff]
    %v1812 = vld [vmem:[%s1795 + $0x80] sm:$0xff]
    %v1813 = vld [vmem:[%s1795 + $0x88] sm:$0xff]
    %v1814 = vld [vmem:[%s1795 + $0x90] sm:$0xff]
    %v1815 = vld [vmem:[%s1795 + $0x98] sm:$0xff]
    %v1816 = vld [vmem:[%s1795 + $0xa0] sm:$0xff]
    %v1817 = vld [vmem:[%s1795 + $0xa8] sm:$0xff]
    %v1818 = vld [vmem:[%s1795 + $0xb0] sm:$0xff]
    %v1819 = vld [vmem:[%s1795 + $0xb8] sm:$0xff]
    %v1820 = vld [vmem:[%s1795 + $0xc0] sm:$0xff]
    %v1821 = vld [vmem:[%s1795 + $0xc8] sm:$0xff]
    %v1822 = vld [vmem:[%s1795 + $0xd0] sm:$0xff]
    %v1823 = vld [vmem:[%s1795 + $0xd8] sm:$0xff]
    %v1824 = vld [vmem:[%s1795 + $0xe0] sm:$0xff]
    %v1825 = vld [vmem:[%s1795 + $0xe8] sm:$0xff]
    %v1826 = vld [vmem:[%s1795 + $0xf0] sm:$0xff]
    %v1827 = vld [vmem:[%s1795 + $0xf8] sm:$0xff]
    %v1860 = vunpack.c.l.b16 %v1796
    %v1861 = vunpack.c.h.b16 %v1796
    %v1862 = vunpack.c.l.b16 %v1797
    %v1863 = vunpack.c.h.b16 %v1797
    %v1864 = vunpack.c.l.b16 %v1798
    %v1865 = vunpack.c.h.b16 %v1798
    %v1866 = vunpack.c.l.b16 %v1799
    %v1867 = vunpack.c.h.b16 %v1799
    %v1868 = vunpack.c.l.b16 %v1800
    %v1869 = vunpack.c.h.b16 %v1800
    %v1870 = vunpack.c.l.b16 %v1801
    %v1871 = vunpack.c.h.b16 %v1801
    %v1872 = vunpack.c.l.b16 %v1802
    %v1873 = vunpack.c.h.b16 %v1802
    %v1874 = vunpack.c.l.b16 %v1803
    %v1875 = vunpack.c.h.b16 %v1803
    %v1876 = vunpack.c.l.b16 %v1804
    %v1877 = vunpack.c.h.b16 %v1804
    %v1878 = vunpack.c.l.b16 %v1805
    %v1879 = vunpack.c.h.b16 %v1805
    %v1880 = vunpack.c.l.b16 %v1806
    %v1881 = vunpack.c.h.b16 %v1806
    %v1882 = vunpack.c.l.b16 %v1807
    %v1883 = vunpack.c.h.b16 %v1807
    %v1884 = vunpack.c.l.b16 %v1808
    %v1885 = vunpack.c.h.b16 %v1808
    %v1886 = vunpack.c.l.b16 %v1809
    %v1887 = vunpack.c.h.b16 %v1809
    %v1888 = vunpack.c.l.b16 %v1810
    %v1889 = vunpack.c.h.b16 %v1810
    %v1890 = vunpack.c.l.b16 %v1811
    %v1891 = vunpack.c.h.b16 %v1811
    %v1892 = vunpack.c.l.b16 %v1812
    %v1893 = vunpack.c.h.b16 %v1812
    %v1894 = vunpack.c.l.b16 %v1813
    %v1895 = vunpack.c.h.b16 %v1813
    %v1896 = vunpack.c.l.b16 %v1814
    %v1897 = vunpack.c.h.b16 %v1814
    %v1898 = vunpack.c.l.b16 %v1815
    %v1899 = vunpack.c.h.b16 %v1815
    %v1900 = vunpack.c.l.b16 %v1816
    %v1901 = vunpack.c.h.b16 %v1816
    %v1902 = vunpack.c.l.b16 %v1817
    %v1903 = vunpack.c.h.b16 %v1817
    %v1904 = vunpack.c.l.b16 %v1818
    %v1905 = vunpack.c.h.b16 %v1818
    %v1906 = vunpack.c.l.b16 %v1819
    %v1907 = vunpack.c.h.b16 %v1819
    %v1908 = vunpack.c.l.b16 %v1820
    %v1909 = vunpack.c.h.b16 %v1820
    %v1910 = vunpack.c.l.b16 %v1821
    %v1911 = vunpack.c.h.b16 %v1821
    %v1912 = vunpack.c.l.b16 %v1822
    %v1913 = vunpack.c.h.b16 %v1822
    %v1914 = vunpack.c.l.b16 %v1823
    %v1915 = vunpack.c.h.b16 %v1823
    %v1916 = vunpack.c.l.b16 %v1824
    %v1917 = vunpack.c.h.b16 %v1824
    %v1918 = vunpack.c.l.b16 %v1825
    %v1919 = vunpack.c.h.b16 %v1825
    %v1920 = vunpack.c.l.b16 %v1826
    %v1921 = vunpack.c.h.b16 %v1826
    %v1922 = vunpack.c.l.b16 %v1827
    %v1923 = vunpack.c.h.b16 %v1827
    %v1924 = vpack.c.b16 %v1864, %v1860
    %v1925 = vpack.c.b16 %v1865, %v1861
    %v1926 = vpack.c.b16 %v1866, %v1862
    %v1927 = vpack.c.b16 %v1867, %v1863
    %v1928 = vpack.c.b16 %v1872, %v1868
    %v1929 = vpack.c.b16 %v1873, %v1869
    %v1930 = vpack.c.b16 %v1874, %v1870
    %v1931 = vpack.c.b16 %v1875, %v1871
    %v1932 = vpack.c.b16 %v1880, %v1876
    %v1933 = vpack.c.b16 %v1881, %v1877
    %v1934 = vpack.c.b16 %v1882, %v1878
    %v1935 = vpack.c.b16 %v1883, %v1879
    %v1936 = vpack.c.b16 %v1888, %v1884
    %v1937 = vpack.c.b16 %v1889, %v1885
    %v1938 = vpack.c.b16 %v1890, %v1886
    %v1939 = vpack.c.b16 %v1891, %v1887
    %v1940 = vpack.c.b16 %v1896, %v1892
    %v1941 = vpack.c.b16 %v1897, %v1893
    %v1942 = vpack.c.b16 %v1898, %v1894
    %v1943 = vpack.c.b16 %v1899, %v1895
    %v1944 = vpack.c.b16 %v1904, %v1900
    %v1945 = vpack.c.b16 %v1905, %v1901
    %v1946 = vpack.c.b16 %v1906, %v1902
    %v1947 = vpack.c.b16 %v1907, %v1903
    %v1948 = vpack.c.b16 %v1912, %v1908
    %v1949 = vpack.c.b16 %v1913, %v1909
    %v1950 = vpack.c.b16 %v1914, %v1910
    %v1951 = vpack.c.b16 %v1915, %v1911
    %v1952 = vpack.c.b16 %v1920, %v1916
    %v1953 = vpack.c.b16 %v1921, %v1917
    %v1954 = vpack.c.b16 %v1922, %v1918
    %v1955 = vpack.c.b16 %v1923, %v1919
    %1988 = vmatprep.subr.bf16.mxu0 %v1925
    %1989 = vmatpush1.bf16.msra.mxu0 %v1924
    %1990 = vmatprep.subr.bf16.mxu0 %v1929
    %1991 = vmatpush1.bf16.msra.mxu0 %v1928
    %1992 = vmatprep.subr.bf16.mxu0 %v1933
    %1993 = vmatpush1.bf16.msra.mxu0 %v1932
    %1994 = vmatprep.subr.bf16.mxu0 %v1937
    %1995 = vmatpush1.bf16.msra.mxu0 %v1936
    %1996 = vmatprep.subr.bf16.mxu0 %v1941
    %1997 = vmatpush1.bf16.msra.mxu0 %v1940
    %1998 = vmatprep.subr.bf16.mxu0 %v1945
    %1999 = vmatpush1.bf16.msra.mxu0 %v1944
    %2000 = vmatprep.subr.bf16.mxu0 %v1949
    %2001 = vmatpush1.bf16.msra.mxu0 %v1948
    %2002 = vmatprep.subr.bf16.mxu0 %v1953
    %2003 = vmatpush1.bf16.msra.mxu0 %v1952
    %2004 = vmatprep.subr.bf16.mxu0 0
    %2005 = vmatpush1.bf16.msra.mxu0 0
    %2006 = vmatprep.subr.bf16.mxu0 0
    %2007 = vmatpush1.bf16.msra.mxu0 0
    %2008 = vmatprep.subr.bf16.mxu0 0
    %2009 = vmatpush1.bf16.msra.mxu0 0
    %2010 = vmatprep.subr.bf16.mxu0 0
    %2011 = vmatpush1.bf16.msra.mxu0 0
    %2012 = vmatprep.subr.bf16.mxu0 0
    %2013 = vmatpush1.bf16.msra.mxu0 0
    %2014 = vmatprep.subr.bf16.mxu0 0
    %2015 = vmatpush1.bf16.msra.mxu0 0
    %2016 = vmatprep.subr.bf16.mxu0 0
    %2017 = vmatpush1.bf16.msra.mxu0 0
    %2018 = vmatprep.subr.bf16.mxu0 0
    %2019 = vmatpush1.bf16.msra.mxu0 0
    %2020 = vmatprep.mubr.bf16.mxu0 0
    %2021 = vmatmul.mubr.bf16.gmra.mrb[0].mxu0 %v1793
    %v2022 = vpop.f32.mrb[0].mxu0
    %v2023 = vadd.f32 0.0, %v2022
    %v2024 = vpop.f32.mrb[0].mxu0
    %v2025 = vadd.f32 0.0, %v2024
    %v2026 = vpop.f32.mrb[0].mxu0
    %v2027 = vadd.f32 0.0, %v2026
    %v2028 = vpop.f32.mrb[0].mxu0
    %v2029 = vadd.f32 0.0, %v2028
    %2030 = vmatprep.mubr.bf16.mxu0 0
    %2031 = vmatmul.mubr.bf16.gmra.mrb[0].mxu0 %v1794
    %v2032 = vpop.f32.mrb[0].mxu0
    %v2033 = vadd.f32 0.0, %v2032
    %v2034 = vpop.f32.mrb[0].mxu0
    %v2035 = vadd.f32 0.0, %v2034
    %v2036 = vpop.f32.mrb[0].mxu0
    %v2037 = vadd.f32 0.0, %v2036
    %v2038 = vpop.f32.mrb[0].mxu0
    %v2039 = vadd.f32 0.0, %v2038
    %2040 = vdwg.mxu0
    %2041 = vmatprep.subr.bf16.mxu0 %v1927
    %2042 = vmatpush1.bf16.msra.mxu0 %v1926
    %2043 = vmatprep.subr.bf16.mxu0 %v1931
    %2044 = vmatpush1.bf16.msra.mxu0 %v1930
    %2045 = vmatprep.subr.bf16.mxu0 %v1935
    %2046 = vmatpush1.bf16.msra.mxu0 %v1934
    %2047 = vmatprep.subr.bf16.mxu0 %v1939
    %2048 = vmatpush1.bf16.msra.mxu0 %v1938
    %2049 = vmatprep.subr.bf16.mxu0 %v1943
    %2050 = vmatpush1.bf16.msra.mxu0 %v1942
    %2051 = vmatprep.subr.bf16.mxu0 %v1947
    %2052 = vmatpush1.bf16.msra.mxu0 %v1946
    %2053 = vmatprep.subr.bf16.mxu0 %v1951
    %2054 = vmatpush1.bf16.msra.mxu0 %v1950
    %2055 = vmatprep.subr.bf16.mxu0 %v1955
    %2056 = vmatpush1.bf16.msra.mxu0 %v1954
    %2057 = vmatprep.subr.bf16.mxu0 0
    %2058 = vmatpush1.bf16.msra.mxu0 0
    %2059 = vmatprep.subr.bf16.mxu0 0
    %2060 = vmatpush1.bf16.msra.mxu0 0
    %2061 = vmatprep.subr.bf16.mxu0 0
    %2062 = vmatpush1.bf16.msra.mxu0 0
    %2063 = vmatprep.subr.bf16.mxu0 0
    %2064 = vmatpush1.bf16.msra.mxu0 0
    %2065 = vmatprep.subr.bf16.mxu0 0
    %2066 = vmatpush1.bf16.msra.mxu0 0
    %2067 = vmatprep.subr.bf16.mxu0 0
    %2068 = vmatpush1.bf16.msra.mxu0 0
    %2069 = vmatprep.subr.bf16.mxu0 0
    %2070 = vmatpush1.bf16.msra.mxu0 0
    %2071 = vmatprep.subr.bf16.mxu0 0
    %2072 = vmatpush1.bf16.msra.mxu0 0
    %2073 = vmatprep.mubr.bf16.mxu0 0
    %2074 = vmatmul.mubr.bf16.gmra.mrb[0].mxu0 %v1793
    %v2075 = vpop.f32.mrb[0].mxu0
    %v2076 = vadd.f32 0.0, %v2075
    %v2077 = vpop.f32.mrb[0].mxu0
    %v2078 = vadd.f32 0.0, %v2077
    %v2079 = vpop.f32.mrb[0].mxu0
    %v2080 = vadd.f32 0.0, %v2079
    %v2081 = vpop.f32.mrb[0].mxu0
    %v2082 = vadd.f32 0.0, %v2081
    %2083 = vmatprep.mubr.bf16.mxu0 0
    %2084 = vmatmul.mubr.bf16.gmra.mrb[0].mxu0 %v1794
    %v2085 = vpop.f32.mrb[0].mxu0
    %v2086 = vadd.f32 0.0, %v2085
    %v2087 = vpop.f32.mrb[0].mxu0
    %v2088 = vadd.f32 0.0, %v2087
    %v2089 = vpop.f32.mrb[0].mxu0
    %v2090 = vadd.f32 0.0, %v2089
    %v2091 = vpop.f32.mrb[0].mxu0
    %v2092 = vadd.f32 0.0, %v2091
    %2093 = vdwg.mxu0
    %v2094 = vpack.c.bf16 %v2027, %v2023
    %v2095 = vpack.c.bf16 %v2037, %v2033
    %2096 = vst [vmem:[#allocation2] sm:$0xff] %v2094
    %2097 = vst [vmem:[#allocation2 + $0x8] sm:$0xff] %v2095
    %v2098 = vpack.c.bf16 %v2029, %v2025
    %v2099 = vpack.c.bf16 %v2039, %v2035
    %2100 = vst [vmem:[#allocation2 + $0x10] sm:$0xff] %v2098
    %2101 = vst [vmem:[#allocation2 + $0x18] sm:$0xff] %v2099
    %v2102 = vpack.c.bf16 %v2080, %v2076
    %v2103 = vpack.c.bf16 %v2090, %v2086
    %2104 = vst [vmem:[#allocation2 + $0x20] sm:$0xff] %v2102
    %2105 = vst [vmem:[#allocation2 + $0x28] sm:$0xff] %v2103
    %v2106 = vpack.c.bf16 %v2082, %v2078
    %v2107 = vpack.c.bf16 %v2092, %v2088
    %2108 = vst [vmem:[#allocation2 + $0x30] sm:$0xff] %v2106
    %2109 = vst [vmem:[#allocation2 + $0x38] sm:$0xff] %v2107
    %s2110 = scalar_lea.vmem %s1, 64
    %v2111 = vld [vmem:[%s2110] sm:$0xf]
    %v2112 = vld [vmem:[%s2110 + $0x4] sm:$0xf]
    %v2113 = vld [vmem:[%s2110 + $0x8] sm:$0xf]
    %v2114 = vld [vmem:[%s2110 + $0xc] sm:$0xf]
    %v2115 = vld [vmem:[#allocation2] sm:$0xff]
    %v2116 = vld [vmem:[#allocation2 + $0x8] sm:$0xff]
    %v2117 = vld [vmem:[#allocation2 + $0x10] sm:$0xff]
    %v2118 = vld [vmem:[#allocation2 + $0x18] sm:$0xff]
    %v2119 = vld [vmem:[#allocation2 + $0x20] sm:$0xff]
    %v2120 = vld [vmem:[#allocation2 + $0x28] sm:$0xff]
    %v2121 = vld [vmem:[#allocation2 + $0x30] sm:$0xff]
    %v2122 = vld [vmem:[#allocation2 + $0x38] sm:$0xff]
    %v2127 = vunpack.c.l.b16 %v2111
    %v2128 = vunpack.c.l.b16 %v2112
    %v2129 = vunpack.c.l.b16 %v2113
    %v2130 = vunpack.c.l.b16 %v2114
    %v2131 = vpack.c.b16 %v2128, %v2127
    %v2132 = vpack.c.b16 %v2130, %v2129
    %2135 = vmatprep.subr.bf16.mxu0 0
    %2136 = vmatpush1.bf16.msra.mxu0 %v2115
    %2137 = vmatprep.subr.bf16.mxu0 0
    %2138 = vmatpush1.bf16.msra.mxu0 %v2116
    %2139 = vmatprep.subr.bf16.mxu0 0
    %2140 = vmatpush1.bf16.msra.mxu0 %v2117
    %2141 = vmatprep.subr.bf16.mxu0 0
    %2142 = vmatpush1.bf16.msra.mxu0 %v2118
    %2143 = vmatprep.subr.bf16.mxu0 0
    %2144 = vmatpush1.bf16.msra.mxu0 %v2119
    %2145 = vmatprep.subr.bf16.mxu0 0
    %2146 = vmatpush1.bf16.msra.mxu0 %v2120
    %2147 = vmatprep.subr.bf16.mxu0 0
    %2148 = vmatpush1.bf16.msra.mxu0 %v2121
    %2149 = vmatprep.subr.bf16.mxu0 0
    %2150 = vmatpush1.bf16.msra.mxu0 %v2122
    %2151 = vmatprep.subr.bf16.mxu0 0
    %2152 = vmatpush1.bf16.msra.mxu0 0
    %2153 = vmatprep.subr.bf16.mxu0 0
    %2154 = vmatpush1.bf16.msra.mxu0 0
    %2155 = vmatprep.subr.bf16.mxu0 0
    %2156 = vmatpush1.bf16.msra.mxu0 0
    %2157 = vmatprep.subr.bf16.mxu0 0
    %2158 = vmatpush1.bf16.msra.mxu0 0
    %2159 = vmatprep.subr.bf16.mxu0 0
    %2160 = vmatpush1.bf16.msra.mxu0 0
    %2161 = vmatprep.subr.bf16.mxu0 0
    %2162 = vmatpush1.bf16.msra.mxu0 0
    %2163 = vmatprep.subr.bf16.mxu0 0
    %2164 = vmatpush1.bf16.msra.mxu0 0
    %2165 = vmatprep.subr.bf16.mxu0 0
    %2166 = vmatpush1.bf16.msra.mxu0 0
    %2167 = vmatprep.mubr.bf16.mxu0 0
    %2168 = vmatmul.mubr.bf16.gmra.mrb[0].mxu0 %v2131
    %v2169 = vpop.f32.mrb[0].mxu0
    %v2170 = vadd.f32 0.0, %v2169
    %v2171 = vpop.f32.mrb[0].mxu0
    %v2172 = vpop.f32.mrb[0].mxu0
    %v2173 = vadd.f32 0.0, %v2172
    %v2174 = vpop.f32.mrb[0].mxu0
    %2175 = vmatprep.mubr.bf16.mxu0 0
    %2176 = vmatmul.mubr.bf16.gmra.mrb[0].mxu0 %v2132
    %v2177 = vpop.f32.mrb[0].mxu0
    %v2178 = vadd.f32 0.0, %v2177
    %v2179 = vpop.f32.mrb[0].mxu0
    %v2180 = vpop.f32.mrb[0].mxu0
    %v2181 = vadd.f32 0.0, %v2180
    %v2182 = vpop.f32.mrb[0].mxu0
    %2183 = vdwg.mxu0
    %v2184 = vxor.u32 %v2170, 2147483648
    %v2185 = vxor.u32 %v2173, 2147483648
    %v2186 = vxor.u32 %v2178, 2147483648
    %v2187 = vxor.u32 %v2181, 2147483648
    %v2188 = vmul.f32 %v2184, 1.442695
    %v2189 = vpow.pop %v2188
    %v2190 = vmul.f32 %v2185, 1.442695
    %v2191 = vpow.pop %v2190
    %v2192 = vmul.f32 %v2186, 1.442695
    %v2193 = vpow.pop %v2192
    %v2194 = vmul.f32 %v2187, 1.442695
    %v2195 = vpow.pop %v2194
    %v2196 = vadd.f32 %v2189, 1.0
    %v2197 = vadd.f32 %v2191, 1.0
    %v2198 = vadd.f32 %v2193, 1.0
    %v2199 = vadd.f32 %v2195, 1.0
    %v2200 = vrcp.pop %v2196
    %v2201 = vmul.f32 1.0, %v2200
    %v2202 = vrcp.pop %v2197
    %v2203 = vmul.f32 1.0, %v2202
    %v2204 = vrcp.pop %v2198
    %v2205 = vmul.f32 1.0, %v2204
    %v2206 = vrcp.pop %v2199
    %v2207 = vmul.f32 1.0, %v2206
    %2208 = vst [vmem:[%s4] sm:$0xff] %v2201
    %2209 = vst [vmem:[%s4 + $0x8] sm:$0xff] %v2203
    %2210 = vst [vmem:[%s4 + $0x10] sm:$0xff] %v2205
    %2211 = vst [vmem:[%s4 + $0x18] sm:$0xff] %v2207
    // Predicated region
    $region22: #{forward.1} parent=1 // pred_check
      _
    $region23: #{forward.1} parent=1 // pred_check_branch
      %2213 = sbr.rel (0) target = $region25
    $region24: #{forward.1} parent=1 // pred_region
      _
    $region25: #{forward.1} parent=1 // pred_fallthru
      _
    // Predicated region
    $region26: #{forward.1} parent=1 // pred_check
      _
    $region27: #{forward.1} parent=1 // pred_check_branch
      %2215 = sbr.rel (0) target = $region29
    $region28: #{forward.1} parent=1 // pred_region
      _
    $region29: #{forward.1} parent=1 // pred_fallthru
      _
    %2216 = vsyncpa [#allocation4], 1

</llo_original>
